<compile_context>
chip_gen: v5e
topology: v5e:2x2
jax: 0.10.0
libtpu: 0.0.40
codegen_flags: <defaults>
</compile_context>

<pallas_src>
import functools
import math

import jax
import jax.numpy as jnp
from jax.experimental import pallas as pl
from jax.experimental.pallas import tpu as pltpu


# --------------------------------- fused kernel ----------------------------------------

def _fused_kernel(start_idx, stop_idx,
                  sent_ref,                                     # SMEM prefetch: (B, seq) i32
                  emb_ref, wih_ref, whh_ref, bpack_ref, wp_ref, trans_ref,
                  score_ref, tag_ref):
    """
    emb_ref    : (vocab, D)    embedding table (VMEM-resident across grid steps)
    wih_ref    : (D, 16H)      hoisted input->gate weights (fwd block | bwd block)
    whh_ref    : (2H, 8H)      block-diagonal recurrent weights (fused gate layout)
    bpack_ref  : (1, 8H+T)     [bias_ih+bias_hh (fused layout) | projection bias]
    wp_ref     : (2H, T)       projection weight (rows 0:H fwd half, H:2H bwd half)
    trans_ref  : (T, T)        CRF transition matrix
    score_ref  : (1, 1)   OUT  best path score for this sentence
    tag_ref    : (1, seq) OUT  decoded tag sequence for this sentence
    """
    seq = tag_ref.shape[1]
    H = whh_ref.shape[0] // 2
    T = trans_ref.shape[0]
    b = pl.program_id(0)

    # ---- in-kernel embedding gather (dynamic row slices of the tiny VMEM table) -------
    rows = [emb_ref[pl.ds(sent_ref[b, s], 1), :] for s in range(seq)]
    x = jnp.concatenate(rows, axis=0)                              # (seq, D)

    # ---- hoisted input->gate projections, kept as values (vregs, no scratch) ----------
    xg_f = jnp.dot(x, wih_ref[:, 0:8 * H], preferred_element_type=jnp.float32)      # (seq,8H)
    xg_b = jnp.dot(x, wih_ref[:, 8 * H:16 * H], preferred_element_type=jnp.float32)  # (seq,8H)

    b_cat = bpack_ref[:, 0:8 * H]                                  # (1, 8H)
    bp = bpack_ref[:, 8 * H:8 * H + T]                             # (1, T)

    # ---- fused fwd+bwd LSTM recurrence; h/c and per-step hiddens carried in vregs -----
    # TODO(synk): nn.LSTM inter-layer dropout is a no-op for layers_num=1; not implemented.
    # TODO(synk): if the bundle dump shows Mosaic re-pushing whh into the MXU every step,
    #             stage it once with pltpu.matmul_push_rhs / matmul_acc_lhs / matmul_pop.
    h = jnp.zeros((1, 2 * H), jnp.float32)                         # [h_fwd | h_bwd]
    c = jnp.zeros((1, 2 * H), jnp.float32)
    hf_rows = [None] * seq
    hb_rows = [None] * seq
    for s in range(seq):
        r = seq - 1 - s
        gates = (xg_f[s:s + 1, :] + xg_b[r:r + 1, :]
                 + jnp.dot(h, whh_ref[...], preferred_element_type=jnp.float32)
                 + b_cat)
        sio = jax.nn.sigmoid(gates[:, 0:6 * H])                    # i|f|o for both directions
        g = jnp.tanh(gates[:, 6 * H:8 * H])                        # g for both directions
        i_g = sio[:, 0:2 * H]
        f_g = sio[:, 2 * H:4 * H]
        o_g = sio[:, 4 * H:6 * H]
        c = f_g * c + i_g * g
        h = o_g * jnp.tanh(c)
        hf_rows[s] = h[:, 0:H]                                     # forward hidden at time s
        hb_rows[r] = h[:, H:2 * H]                                 # backward hidden at time r

    hf = jnp.concatenate(hf_rows, axis=0)                          # (seq, H)
    hb = jnp.concatenate(hb_rows, axis=0)                          # (seq, H)

    # ---- projection to tag space + log_softmax (PyTorch F.log_softmax dim=1) ----------
    tag_space = (jnp.dot(hf, wp_ref[0:H, :], preferred_element_type=jnp.float32)
                 + jnp.dot(hb, wp_ref[H:2 * H, :], preferred_element_type=jnp.float32)
                 + bp)
    m = jnp.max(tag_space, axis=1, keepdims=True)
    z = tag_space - m
    feats = z - jnp.log(jnp.sum(jnp.exp(z), axis=1, keepdims=True))          # (seq, T)

    # ---- Viterbi forward recursion (column-carried, no transposes) --------------------
    col_iota = jax.lax.broadcasted_iota(jnp.int32, (T, 1), 0)
    sub_iota = jax.lax.broadcasted_iota(jnp.int32, (T, T), 0)      # [i, j] = i
    lane_iota_tt = jax.lax.broadcasted_iota(jnp.int32, (T, T), 1)  # [i, j] = j
    diag_mask = sub_iota == lane_iota_tt

    v = jnp.where(col_iota == start_idx, 0.0, -10000.0).astype(jnp.float32)  # (T, 1)
    ptrs = [None] * seq
    for t in range(seq):
        temp = v + trans_ref[...]                                  # temp[i,j]=v[i]+trans[i,j]
        m_row = jnp.max(temp, axis=0, keepdims=True)               # (1, T)
        if t > 0:  # back-trace never reads ptrs[0]
            ptrs[t] = jnp.min(jnp.where(temp == m_row, sub_iota, T),
                              axis=0, keepdims=True)               # (1, T) argmax (lowest idx)
        v_row = m_row + feats[t:t + 1, :]                          # (1, T)
        # row -> column without a transpose: diagonal select + lane reduction.
        v = jnp.sum(jnp.where(diag_mask, v_row, 0.0), axis=1, keepdims=True)  # (T, 1)

    final = v + trans_ref[:, stop_idx:stop_idx + 1]                # (T, 1)
    fmax = jnp.max(final, axis=0, keepdims=True)                   # (1, 1)
    fbest = jnp.min(jnp.where(final == fmax, col_iota, T),
                    axis=0, keepdims=True)                         # (1, 1) int32
    score_ref[...] = fmax

    # ---- in-kernel back-trace (masked lookups; back-pointers never hit HBM) -----------
    lane_iota_t = jax.lax.broadcasted_iota(jnp.int32, (1, T), 1)
    lane_iota_s = jax.lax.broadcasted_iota(jnp.int32, (1, seq), 1)
    cur = fbest                                                    # (1, 1) int32
    tagvec = jnp.where(lane_iota_s == (seq - 1), cur, jnp.zeros((1, seq), jnp.int32))
    for t in range(seq - 1, 0, -1):
        cur = jnp.sum(jnp.where(lane_iota_t == cur, ptrs[t], 0), axis=1, keepdims=True)
        tagvec = jnp.where(lane_iota_s == (t - 1), cur, tagvec)
    tag_ref[...] = tagvec


def _fused_call(sents, p):
    B, seq = sents.shape
    vocab, D = p["embedding"].shape
    H = p["whh_cat"].shape[0] // 2
    T = p["trans"].shape[0]

    const = lambda b, sent_ref: (0, 0)          # weights: same block every grid step
    kernel = functools.partial(_fused_kernel, int(p["start_idx"]), int(p["stop_idx"]))

    score, tags = pl.pallas_call(
        kernel,
        out_shape=(jax.ShapeDtypeStruct((B, 1, 1), jnp.float32),
                   jax.ShapeDtypeStruct((B, 1, seq), jnp.int32)),
        grid_spec=pltpu.PrefetchScalarGridSpec(
            num_scalar_prefetch=1,
            grid=(B,),
            in_specs=[
                pl.BlockSpec((vocab, D), const),
                pl.BlockSpec((D, 16 * H), const),
                pl.BlockSpec((2 * H, 8 * H), const),
                pl.BlockSpec((1, 8 * H + T), const),
                pl.BlockSpec((2 * H, T), const),
                pl.BlockSpec((T, T), const),
            ],
            out_specs=(pl.BlockSpec((None, 1, 1), lambda b, sent_ref: (b, 0, 0)),
                       pl.BlockSpec((None, 1, seq), lambda b, sent_ref: (b, 0, 0))),
        ),
        compiler_params=pltpu.CompilerParams(dimension_semantics=("parallel",)),
    )(sents, p["embedding"], p["wih_big"], p["whh_cat"], p["b_pack"], p["wp"], p["trans"])
    return score.reshape(B), tags.reshape(B, seq)


# ------------------------------------ Forward pass -------------------------------------

def bilstm_crf_forward(sents, params):
    """sents: (B, seq) int32 token ids. Returns (scores (B,), tags (B, seq))."""
    return _fused_call(sents, params)


# --------------------------------- Parameter init (synthetic) --------------------------

def _split_gates(w, H):
    # PyTorch nn.LSTM gate order along dim 0: [i, f, g, o]
    return w[0:H], w[H:2 * H], w[2 * H:3 * H], w[3 * H:4 * H]


def _place_dir(w4h, H, is_fwd):
    """Place one direction's (4H, X) weight into an (X, 8H) matrix in the fused gate
    column layout [i_f, i_b, f_f, f_b, o_f, o_b, g_f, g_b]; other direction cols = 0."""
    i_w, f_w, g_w, o_w = _split_gates(w4h, H)
    X = w4h.shape[1]
    off = 0 if is_fwd else H
    M = jnp.zeros((X, 8 * H), jnp.float32)
    M = M.at[:, off + 0 * H:off + 1 * H].set(i_w.T)
    M = M.at[:, off + 2 * H:off + 3 * H].set(f_w.T)
    M = M.at[:, off + 4 * H:off + 5 * H].set(o_w.T)
    M = M.at[:, off + 6 * H:off + 7 * H].set(g_w.T)
    return M


def _fuse_bias(bf, bb, H):
    bif, bff, bgf, bof = _split_gates(bf, H)
    bib, bfb, bgb, bob = _split_gates(bb, H)
    return jnp.concatenate([bif, bib, bff, bfb, bof, bob, bgf, bgb]).reshape(1, 8 * H)


def init_params(key, vocab_size, input_dim, hidden_dim, tag_size, start_idx, stop_idx):
    D, H, T = input_dim, hidden_dim, tag_size
    ks = jax.random.split(key, 12)
    s = 1.0 / math.sqrt(H)
    u = lambda k, shape: jax.random.uniform(k, shape, jnp.float32, -s, s)

    emb = jax.random.normal(ks[0], (vocab_size, D), jnp.float32)
    # PyTorch nn.LSTM layout: weight_ih (4H, D), weight_hh (4H, H), biases (4H,)
    w_ih_f, w_hh_f = u(ks[1], (4 * H, D)), u(ks[2], (4 * H, H))
    b_ih_f, b_hh_f = u(ks[3], (4 * H,)), u(ks[4], (4 * H,))
    w_ih_b, w_hh_b = u(ks[5], (4 * H, D)), u(ks[6], (4 * H, H))
    b_ih_b, b_hh_b = u(ks[7], (4 * H,)), u(ks[8], (4 * H,))
    # nn.Linear(2H, T)
    w_proj = u(ks[9], (T, 2 * H))
    b_proj = u(ks[10], (T,))
    trans = jax.random.normal(ks[11], (T, T), jnp.float32)
    trans = trans.at[:, start_idx].set(-10000.0)
    trans = trans.at[stop_idx, :].set(-10000.0)

    # hoisted input projection weight: (D, 16H); cols 0:8H fwd-gate block, 8H:16H bwd.
    wih_big = jnp.concatenate([_place_dir(w_ih_f, H, True),
                               _place_dir(w_ih_b, H, False)], axis=1)
    # block-diagonal recurrent weight: (2H, 8H); h_f feeds only fwd cols, h_b only bwd.
    whh_cat = jnp.concatenate([_place_dir(w_hh_f, H, True),
                               _place_dir(w_hh_b, H, False)], axis=0)
    b_cat = _fuse_bias(b_ih_f + b_hh_f, b_ih_b + b_hh_b, H)
    # pack fused LSTM bias + projection bias into one flat buffer (fewer tiny DMAs).
    b_pack = jnp.concatenate([b_cat, b_proj.reshape(1, T)], axis=1)       # (1, 8H+T)
    wp = w_proj.T                                                         # (2H, T)

    return dict(
        embedding=emb,
        wih_big=wih_big, whh_cat=whh_cat, b_pack=b_pack, wp=wp,
        trans=trans,
        start_idx=start_idx, stop_idx=stop_idx,
        raw=dict(w_ih_f=w_ih_f, w_hh_f=w_hh_f, b_ih_f=b_ih_f, b_hh_f=b_hh_f,
                 w_ih_b=w_ih_b, w_hh_b=w_hh_b, b_ih_b=b_ih_b, b_hh_b=b_hh_b,
                 w_proj=w_proj, b_proj=b_proj),
    )


# ------------------------------------ Pure-JAX reference -------------------------------

def _lstm_cell_ref(x, h, c, wih, whh, bih, bhh, H):
    g = wih @ x + bih + whh @ h + bhh
    i = jax.nn.sigmoid(g[0:H]); f = jax.nn.sigmoid(g[H:2 * H])
    gg = jnp.tanh(g[2 * H:3 * H]); o = jax.nn.sigmoid(g[3 * H:4 * H])
    c = f * c + i * gg
    return o * jnp.tanh(c), c


def forward_ref(sent, params, H):
    r = params["raw"]
    x = jnp.take(params["embedding"], sent, axis=0)
    seq = x.shape[0]
    hf = []
    h = jnp.zeros((H,)); c = jnp.zeros((H,))
    for t in range(seq):
        h, c = _lstm_cell_ref(x[t], h, c, r["w_ih_f"], r["w_hh_f"], r["b_ih_f"], r["b_hh_f"], H)
        hf.append(h)
    hb = [None] * seq
    h = jnp.zeros((H,)); c = jnp.zeros((H,))
    for t in range(seq - 1, -1, -1):
        h, c = _lstm_cell_ref(x[t], h, c, r["w_ih_b"], r["w_hh_b"], r["b_ih_b"], r["b_hh_b"], H)
        hb[t] = h
    out = jnp.concatenate([jnp.stack(hf), jnp.stack(hb)], axis=1)
    feats = jax.nn.log_softmax(out @ r["w_proj"].T + r["b_proj"], axis=1)

    T = feats.shape[1]
    trans = params["trans"]
    v = jnp.full((T,), -10000.0).at[params["start_idx"]].set(0.0)
    ptrs = []
    for t in range(seq):
        temp = v[:, None] + trans
        ptrs.append(jnp.argmax(temp, axis=0))
        v = jnp.max(temp, axis=0) + feats[t]
    v = v + trans[:, params["stop_idx"]]
    score, best = jnp.max(v), jnp.argmax(v)
    tags = [None] * (seq + 1)
    tags[seq] = best
    for t in range(seq - 1, -1, -1):
        tags[t] = ptrs[t][tags[t + 1]]
    return feats, score, jnp.stack(tags[1:])


# ------------------------------------------ Main ---------------------------------------

if __name__ == "__main__":
    vocab_size, input_dim, hidden_dim, seq_len, batch = 20, 16, 32, 8, 2
    tag_dict = {"B": 0, "I": 1, "O": 2, "<START>": 3, "<STOP>": 4}
    start_idx, stop_idx = tag_dict["<START>"], tag_dict["<STOP>"]
    tag_size = len(tag_dict)

    key = jax.random.PRNGKey(0)
    k_param, k_sent = jax.random.split(key)
    params = init_params(k_param, vocab_size, input_dim, hidden_dim, tag_size,
                         start_idx, stop_idx)
    sents = jax.random.randint(k_sent, (batch, seq_len), 0, vocab_size, dtype=jnp.int32)

    scores, tag_seqs = bilstm_crf_forward(sents, params)
    scores = jax.block_until_ready(scores)
    tag_seqs = jax.block_until_ready(tag_seqs)

    # Sanity check against a pure-JAX reference of the same forward pass.
    for b in range(batch):
        _, ref_score, ref_tags = forward_ref(sents[b], params, hidden_dim)
        assert jnp.allclose(scores[b], ref_score, atol=1e-3, rtol=1e-3), (b, scores[b], ref_score)
        assert jnp.array_equal(tag_seqs[b].astype(jnp.int32),
                               ref_tags.astype(jnp.int32)), (b, tag_seqs[b], ref_tags)

    print("KERNEL_OK")
</pallas_src>

<mosaic_0001>
module attributes {stable_mosaic.version = 11 : i64} {
  func.func @_fused_kernel(%arg0: i32, %arg1: memref<2x8xi32, #tpu.memory_space<smem>>, %arg2: memref<20x16xf32, #tpu.memory_space<vmem>>, %arg3: memref<16x512xf32, #tpu.memory_space<vmem>>, %arg4: memref<64x256xf32, #tpu.memory_space<vmem>>, %arg5: memref<1x261xf32, #tpu.memory_space<vmem>>, %arg6: memref<64x5xf32, #tpu.memory_space<vmem>>, %arg7: memref<5x5xf32, #tpu.memory_space<vmem>>, %arg8: memref<1x1x1xf32, #tpu.memory_space<vmem>>, %arg9: memref<1x1x8xi32, #tpu.memory_space<vmem>>) attributes {dimension_semantics = [#tpu.dimension_semantics<parallel>], iteration_bounds = array<i64: 2>, scalar_prefetch = 1 : i64, scratch_operands = 0 : i64, tpu.core_type = #tpu.core_type<tc>, window_params = [{pipeline_mode = #tpu.pipeline_mode<synchronous>, transform_indices = @transform_0, window_bounds = array<i64: 20, 16>}, {pipeline_mode = #tpu.pipeline_mode<synchronous>, transform_indices = @transform_1, window_bounds = array<i64: 16, 512>}, {pipeline_mode = #tpu.pipeline_mode<synchronous>, transform_indices = @transform_2, window_bounds = array<i64: 64, 256>}, {pipeline_mode = #tpu.pipeline_mode<synchronous>, transform_indices = @transform_3, window_bounds = array<i64: 1, 261>}, {pipeline_mode = #tpu.pipeline_mode<synchronous>, transform_indices = @transform_4, window_bounds = array<i64: 64, 5>}, {pipeline_mode = #tpu.pipeline_mode<synchronous>, transform_indices = @transform_5, window_bounds = array<i64: 5, 5>}, {transform_indices = @transform_6, window_bounds = array<i64: 1, 1, 1>}, {transform_indices = @transform_7, window_bounds = array<i64: 1, 1, 8>}]} {
    %0 = arith.index_cast %arg0 : i32 to index
    %c0 = arith.constant 0 : index
    %1 = memref.load %arg1[%0, %c0] : memref<2x8xi32, #tpu.memory_space<smem>>
    %2 = arith.index_cast %1 : i32 to index
    %c0_0 = arith.constant 0 : index
    %3 = vector.load %arg2[%2, %c0_0] : memref<20x16xf32, #tpu.memory_space<vmem>>, vector<1x16xf32>
    %4 = arith.index_cast %arg0 : i32 to index
    %c1 = arith.constant 1 : index
    %5 = memref.load %arg1[%4, %c1] : memref<2x8xi32, #tpu.memory_space<smem>>
    %6 = arith.index_cast %5 : i32 to index
    %c0_1 = arith.constant 0 : index
    %7 = vector.load %arg2[%6, %c0_1] : memref<20x16xf32, #tpu.memory_space<vmem>>, vector<1x16xf32>
    %8 = arith.index_cast %arg0 : i32 to index
    %c2 = arith.constant 2 : index
    %9 = memref.load %arg1[%8, %c2] : memref<2x8xi32, #tpu.memory_space<smem>>
    %10 = arith.index_cast %9 : i32 to index
    %c0_2 = arith.constant 0 : index
    %11 = vector.load %arg2[%10, %c0_2] : memref<20x16xf32, #tpu.memory_space<vmem>>, vector<1x16xf32>
    %12 = arith.index_cast %arg0 : i32 to index
    %c3 = arith.constant 3 : index
    %13 = memref.load %arg1[%12, %c3] : memref<2x8xi32, #tpu.memory_space<smem>>
    %14 = arith.index_cast %13 : i32 to index
    %c0_3 = arith.constant 0 : index
    %15 = vector.load %arg2[%14, %c0_3] : memref<20x16xf32, #tpu.memory_space<vmem>>, vector<1x16xf32>
    %16 = arith.index_cast %arg0 : i32 to index
    %c4 = arith.constant 4 : index
    %17 = memref.load %arg1[%16, %c4] : memref<2x8xi32, #tpu.memory_space<smem>>
    %18 = arith.index_cast %17 : i32 to index
    %c0_4 = arith.constant 0 : index
    %19 = vector.load %arg2[%18, %c0_4] : memref<20x16xf32, #tpu.memory_space<vmem>>, vector<1x16xf32>
    %20 = arith.index_cast %arg0 : i32 to index
    %c5 = arith.constant 5 : index
    %21 = memref.load %arg1[%20, %c5] : memref<2x8xi32, #tpu.memory_space<smem>>
    %22 = arith.index_cast %21 : i32 to index
    %c0_5 = arith.constant 0 : index
    %23 = vector.load %arg2[%22, %c0_5] : memref<20x16xf32, #tpu.memory_space<vmem>>, vector<1x16xf32>
    %24 = arith.index_cast %arg0 : i32 to index
    %c6 = arith.constant 6 : index
    %25 = memref.load %arg1[%24, %c6] : memref<2x8xi32, #tpu.memory_space<smem>>
    %26 = arith.index_cast %25 : i32 to index
    %c0_6 = arith.constant 0 : index
    %27 = vector.load %arg2[%26, %c0_6] : memref<20x16xf32, #tpu.memory_space<vmem>>, vector<1x16xf32>
    %28 = arith.index_cast %arg0 : i32 to index
    %c7 = arith.constant 7 : index
    %29 = memref.load %arg1[%28, %c7] : memref<2x8xi32, #tpu.memory_space<smem>>
    %30 = arith.index_cast %29 : i32 to index
    %c0_7 = arith.constant 0 : index
    %31 = vector.load %arg2[%30, %c0_7] : memref<20x16xf32, #tpu.memory_space<vmem>>, vector<1x16xf32>
    %32 = tpu.concatenate %3, %7, %11, %15, %19, %23, %27, %31 in 0 : vector<1x16xf32>, vector<1x16xf32>, vector<1x16xf32>, vector<1x16xf32>, vector<1x16xf32>, vector<1x16xf32>, vector<1x16xf32>, vector<1x16xf32> -> vector<8x16xf32>
    %c0_8 = arith.constant 0 : index
    %c0_9 = arith.constant 0 : index
    %33 = vector.load %arg3[%c0_8, %c0_9] : memref<16x512xf32, #tpu.memory_space<vmem>>, vector<16x256xf32>
    %cst = arith.constant dense<0.000000e+00> : vector<8x256xf32>
    %34 = tpu.matmul %32, %33, %cst {dimension_numbers = #tpu.dot_dimension_numbers<[1], [0], [0], [1], [0, 0, 1, 1], [], []>} : vector<8x16xf32>, vector<16x256xf32>, vector<8x256xf32> -> vector<8x256xf32>
    %c0_10 = arith.constant 0 : index
    %c256 = arith.constant 256 : index
    %35 = vector.load %arg3[%c0_10, %c256] : memref<16x512xf32, #tpu.memory_space<vmem>>, vector<16x256xf32>
    %cst_11 = arith.constant dense<0.000000e+00> : vector<8x256xf32>
    %36 = tpu.matmul %32, %35, %cst_11 {dimension_numbers = #tpu.dot_dimension_numbers<[1], [0], [0], [1], [0, 0, 1, 1], [], []>} : vector<8x16xf32>, vector<16x256xf32>, vector<8x256xf32> -> vector<8x256xf32>
    %c0_12 = arith.constant 0 : index
    %c0_13 = arith.constant 0 : index
    %37 = vector.load %arg5[%c0_12, %c0_13] : memref<1x261xf32, #tpu.memory_space<vmem>>, vector<1x256xf32>
    %c0_14 = arith.constant 0 : index
    %c256_15 = arith.constant 256 : index
    %38 = vector.load %arg5[%c0_14, %c256_15] : memref<1x261xf32, #tpu.memory_space<vmem>>, vector<1x5xf32>
    %cst_16 = arith.constant 0.000000e+00 : f32
    %39 = vector.broadcast %cst_16 : f32 to vector<1x64xf32>
    %cst_17 = arith.constant 0.000000e+00 : f32
    %40 = vector.broadcast %cst_17 : f32 to vector<1x64xf32>
    %41 = vector.extract_strided_slice %34 {offsets = [0, 0], sizes = [1, 256], strides = [1, 1]} : vector<8x256xf32> to vector<1x256xf32>
    %42 = vector.extract_strided_slice %36 {offsets = [7, 0], sizes = [1, 256], strides = [1, 1]} : vector<8x256xf32> to vector<1x256xf32>
    %43 = arith.addf %41, %42 : vector<1x256xf32>
    %c0_18 = arith.constant 0 : index
    %c0_19 = arith.constant 0 : index
    %44 = vector.load %arg4[%c0_18, %c0_19] : memref<64x256xf32, #tpu.memory_space<vmem>>, vector<64x256xf32>
    %cst_20 = arith.constant dense<0.000000e+00> : vector<1x256xf32>
    %45 = tpu.matmul %39, %44, %cst_20 {dimension_numbers = #tpu.dot_dimension_numbers<[1], [0], [0], [1], [0, 0, 1, 1], [], []>} : vector<1x64xf32>, vector<64x256xf32>, vector<1x256xf32> -> vector<1x256xf32>
    %46 = arith.addf %43, %45 : vector<1x256xf32>
    %47 = arith.addf %46, %37 : vector<1x256xf32>
    %48 = vector.extract_strided_slice %47 {offsets = [0, 0], sizes = [1, 192], strides = [1, 1]} : vector<1x256xf32> to vector<1x192xf32>
    %49 = arith.negf %48 : vector<1x192xf32>
    %50 = math.exp %49 : vector<1x192xf32>
    %cst_21 = arith.constant 1.000000e+00 : f32
    %51 = vector.broadcast %cst_21 : f32 to vector<1x192xf32>
    %52 = arith.addf %51, %50 : vector<1x192xf32>
    %53 = arith.divf %51, %52 : vector<1x192xf32>
    %54 = vector.extract_strided_slice %47 {offsets = [0, 192], sizes = [1, 64], strides = [1, 1]} : vector<1x256xf32> to vector<1x64xf32>
    %55 = math.tanh %54 : vector<1x64xf32>
    %56 = vector.extract_strided_slice %53 {offsets = [0, 0], sizes = [1, 64], strides = [1, 1]} : vector<1x192xf32> to vector<1x64xf32>
    %57 = vector.extract_strided_slice %53 {offsets = [0, 64], sizes = [1, 64], strides = [1, 1]} : vector<1x192xf32> to vector<1x64xf32>
    %58 = vector.extract_strided_slice %53 {offsets = [0, 128], sizes = [1, 64], strides = [1, 1]} : vector<1x192xf32> to vector<1x64xf32>
    %59 = arith.mulf %57, %40 : vector<1x64xf32>
    %60 = arith.mulf %56, %55 : vector<1x64xf32>
    %61 = arith.addf %59, %60 : vector<1x64xf32>
    %62 = math.tanh %61 : vector<1x64xf32>
    %63 = arith.mulf %58, %62 : vector<1x64xf32>
    %64 = vector.extract_strided_slice %63 {offsets = [0, 0], sizes = [1, 32], strides = [1, 1]} : vector<1x64xf32> to vector<1x32xf32>
    %65 = vector.extract_strided_slice %63 {offsets = [0, 32], sizes = [1, 32], strides = [1, 1]} : vector<1x64xf32> to vector<1x32xf32>
    %66 = vector.extract_strided_slice %34 {offsets = [1, 0], sizes = [1, 256], strides = [1, 1]} : vector<8x256xf32> to vector<1x256xf32>
    %67 = vector.extract_strided_slice %36 {offsets = [6, 0], sizes = [1, 256], strides = [1, 1]} : vector<8x256xf32> to vector<1x256xf32>
    %68 = arith.addf %66, %67 : vector<1x256xf32>
    %c0_22 = arith.constant 0 : index
    %c0_23 = arith.constant 0 : index
    %69 = vector.load %arg4[%c0_22, %c0_23] : memref<64x256xf32, #tpu.memory_space<vmem>>, vector<64x256xf32>
    %cst_24 = arith.constant dense<0.000000e+00> : vector<1x256xf32>
    %70 = tpu.matmul %63, %69, %cst_24 {dimension_numbers = #tpu.dot_dimension_numbers<[1], [0], [0], [1], [0, 0, 1, 1], [], []>} : vector<1x64xf32>, vector<64x256xf32>, vector<1x256xf32> -> vector<1x256xf32>
    %71 = arith.addf %68, %70 : vector<1x256xf32>
    %72 = arith.addf %71, %37 : vector<1x256xf32>
    %73 = vector.extract_strided_slice %72 {offsets = [0, 0], sizes = [1, 192], strides = [1, 1]} : vector<1x256xf32> to vector<1x192xf32>
    %74 = arith.negf %73 : vector<1x192xf32>
    %75 = math.exp %74 : vector<1x192xf32>
    %cst_25 = arith.constant 1.000000e+00 : f32
    %76 = vector.broadcast %cst_25 : f32 to vector<1x192xf32>
    %77 = arith.addf %76, %75 : vector<1x192xf32>
    %78 = arith.divf %76, %77 : vector<1x192xf32>
    %79 = vector.extract_strided_slice %72 {offsets = [0, 192], sizes = [1, 64], strides = [1, 1]} : vector<1x256xf32> to vector<1x64xf32>
    %80 = math.tanh %79 : vector<1x64xf32>
    %81 = vector.extract_strided_slice %78 {offsets = [0, 0], sizes = [1, 64], strides = [1, 1]} : vector<1x192xf32> to vector<1x64xf32>
    %82 = vector.extract_strided_slice %78 {offsets = [0, 64], sizes = [1, 64], strides = [1, 1]} : vector<1x192xf32> to vector<1x64xf32>
    %83 = vector.extract_strided_slice %78 {offsets = [0, 128], sizes = [1, 64], strides = [1, 1]} : vector<1x192xf32> to vector<1x64xf32>
    %84 = arith.mulf %82, %61 : vector<1x64xf32>
    %85 = arith.mulf %81, %80 : vector<1x64xf32>
    %86 = arith.addf %84, %85 : vector<1x64xf32>
    %87 = math.tanh %86 : vector<1x64xf32>
    %88 = arith.mulf %83, %87 : vector<1x64xf32>
    %89 = vector.extract_strided_slice %88 {offsets = [0, 0], sizes = [1, 32], strides = [1, 1]} : vector<1x64xf32> to vector<1x32xf32>
    %90 = vector.extract_strided_slice %88 {offsets = [0, 32], sizes = [1, 32], strides = [1, 1]} : vector<1x64xf32> to vector<1x32xf32>
    %91 = vector.extract_strided_slice %34 {offsets = [2, 0], sizes = [1, 256], strides = [1, 1]} : vector<8x256xf32> to vector<1x256xf32>
    %92 = vector.extract_strided_slice %36 {offsets = [5, 0], sizes = [1, 256], strides = [1, 1]} : vector<8x256xf32> to vector<1x256xf32>
    %93 = arith.addf %91, %92 : vector<1x256xf32>
    %c0_26 = arith.constant 0 : index
    %c0_27 = arith.constant 0 : index
    %94 = vector.load %arg4[%c0_26, %c0_27] : memref<64x256xf32, #tpu.memory_space<vmem>>, vector<64x256xf32>
    %cst_28 = arith.constant dense<0.000000e+00> : vector<1x256xf32>
    %95 = tpu.matmul %88, %94, %cst_28 {dimension_numbers = #tpu.dot_dimension_numbers<[1], [0], [0], [1], [0, 0, 1, 1], [], []>} : vector<1x64xf32>, vector<64x256xf32>, vector<1x256xf32> -> vector<1x256xf32>
    %96 = arith.addf %93, %95 : vector<1x256xf32>
    %97 = arith.addf %96, %37 : vector<1x256xf32>
    %98 = vector.extract_strided_slice %97 {offsets = [0, 0], sizes = [1, 192], strides = [1, 1]} : vector<1x256xf32> to vector<1x192xf32>
    %99 = arith.negf %98 : vector<1x192xf32>
    %100 = math.exp %99 : vector<1x192xf32>
    %cst_29 = arith.constant 1.000000e+00 : f32
    %101 = vector.broadcast %cst_29 : f32 to vector<1x192xf32>
    %102 = arith.addf %101, %100 : vector<1x192xf32>
    %103 = arith.divf %101, %102 : vector<1x192xf32>
    %104 = vector.extract_strided_slice %97 {offsets = [0, 192], sizes = [1, 64], strides = [1, 1]} : vector<1x256xf32> to vector<1x64xf32>
    %105 = math.tanh %104 : vector<1x64xf32>
    %106 = vector.extract_strided_slice %103 {offsets = [0, 0], sizes = [1, 64], strides = [1, 1]} : vector<1x192xf32> to vector<1x64xf32>
    %107 = vector.extract_strided_slice %103 {offsets = [0, 64], sizes = [1, 64], strides = [1, 1]} : vector<1x192xf32> to vector<1x64xf32>
    %108 = vector.extract_strided_slice %103 {offsets = [0, 128], sizes = [1, 64], strides = [1, 1]} : vector<1x192xf32> to vector<1x64xf32>
    %109 = arith.mulf %107, %86 : vector<1x64xf32>
    %110 = arith.mulf %106, %105 : vector<1x64xf32>
    %111 = arith.addf %109, %110 : vector<1x64xf32>
    %112 = math.tanh %111 : vector<1x64xf32>
    %113 = arith.mulf %108, %112 : vector<1x64xf32>
    %114 = vector.extract_strided_slice %113 {offsets = [0, 0], sizes = [1, 32], strides = [1, 1]} : vector<1x64xf32> to vector<1x32xf32>
    %115 = vector.extract_strided_slice %113 {offsets = [0, 32], sizes = [1, 32], strides = [1, 1]} : vector<1x64xf32> to vector<1x32xf32>
    %116 = vector.extract_strided_slice %34 {offsets = [3, 0], sizes = [1, 256], strides = [1, 1]} : vector<8x256xf32> to vector<1x256xf32>
    %117 = vector.extract_strided_slice %36 {offsets = [4, 0], sizes = [1, 256], strides = [1, 1]} : vector<8x256xf32> to vector<1x256xf32>
    %118 = arith.addf %116, %117 : vector<1x256xf32>
    %c0_30 = arith.constant 0 : index
    %c0_31 = arith.constant 0 : index
    %119 = vector.load %arg4[%c0_30, %c0_31] : memref<64x256xf32, #tpu.memory_space<vmem>>, vector<64x256xf32>
    %cst_32 = arith.constant dense<0.000000e+00> : vector<1x256xf32>
    %120 = tpu.matmul %113, %119, %cst_32 {dimension_numbers = #tpu.dot_dimension_numbers<[1], [0], [0], [1], [0, 0, 1, 1], [], []>} : vector<1x64xf32>, vector<64x256xf32>, vector<1x256xf32> -> vector<1x256xf32>
    %121 = arith.addf %118, %120 : vector<1x256xf32>
    %122 = arith.addf %121, %37 : vector<1x256xf32>
    %123 = vector.extract_strided_slice %122 {offsets = [0, 0], sizes = [1, 192], strides = [1, 1]} : vector<1x256xf32> to vector<1x192xf32>
    %124 = arith.negf %123 : vector<1x192xf32>
    %125 = math.exp %124 : vector<1x192xf32>
    %cst_33 = arith.constant 1.000000e+00 : f32
    %126 = vector.broadcast %cst_33 : f32 to vector<1x192xf32>
    %127 = arith.addf %126, %125 : vector<1x192xf32>
    %128 = arith.divf %126, %127 : vector<1x192xf32>
    %129 = vector.extract_strided_slice %122 {offsets = [0, 192], sizes = [1, 64], strides = [1, 1]} : vector<1x256xf32> to vector<1x64xf32>
    %130 = math.tanh %129 : vector<1x64xf32>
    %131 = vector.extract_strided_slice %128 {offsets = [0, 0], sizes = [1, 64], strides = [1, 1]} : vector<1x192xf32> to vector<1x64xf32>
    %132 = vector.extract_strided_slice %128 {offsets = [0, 64], sizes = [1, 64], strides = [1, 1]} : vector<1x192xf32> to vector<1x64xf32>
    %133 = vector.extract_strided_slice %128 {offsets = [0, 128], sizes = [1, 64], strides = [1, 1]} : vector<1x192xf32> to vector<1x64xf32>
    %134 = arith.mulf %132, %111 : vector<1x64xf32>
    %135 = arith.mulf %131, %130 : vector<1x64xf32>
    %136 = arith.addf %134, %135 : vector<1x64xf32>
    %137 = math.tanh %136 : vector<1x64xf32>
    %138 = arith.mulf %133, %137 : vector<1x64xf32>
    %139 = vector.extract_strided_slice %138 {offsets = [0, 0], sizes = [1, 32], strides = [1, 1]} : vector<1x64xf32> to vector<1x32xf32>
    %140 = vector.extract_strided_slice %138 {offsets = [0, 32], sizes = [1, 32], strides = [1, 1]} : vector<1x64xf32> to vector<1x32xf32>
    %141 = vector.extract_strided_slice %34 {offsets = [4, 0], sizes = [1, 256], strides = [1, 1]} : vector<8x256xf32> to vector<1x256xf32>
    %142 = vector.extract_strided_slice %36 {offsets = [3, 0], sizes = [1, 256], strides = [1, 1]} : vector<8x256xf32> to vector<1x256xf32>
    %143 = arith.addf %141, %142 : vector<1x256xf32>
    %c0_34 = arith.constant 0 : index
    %c0_35 = arith.constant 0 : index
    %144 = vector.load %arg4[%c0_34, %c0_35] : memref<64x256xf32, #tpu.memory_space<vmem>>, vector<64x256xf32>
    %cst_36 = arith.constant dense<0.000000e+00> : vector<1x256xf32>
    %145 = tpu.matmul %138, %144, %cst_36 {dimension_numbers = #tpu.dot_dimension_numbers<[1], [0], [0], [1], [0, 0, 1, 1], [], []>} : vector<1x64xf32>, vector<64x256xf32>, vector<1x256xf32> -> vector<1x256xf32>
    %146 = arith.addf %143, %145 : vector<1x256xf32>
    %147 = arith.addf %146, %37 : vector<1x256xf32>
    %148 = vector.extract_strided_slice %147 {offsets = [0, 0], sizes = [1, 192], strides = [1, 1]} : vector<1x256xf32> to vector<1x192xf32>
    %149 = arith.negf %148 : vector<1x192xf32>
    %150 = math.exp %149 : vector<1x192xf32>
    %cst_37 = arith.constant 1.000000e+00 : f32
    %151 = vector.broadcast %cst_37 : f32 to vector<1x192xf32>
    %152 = arith.addf %151, %150 : vector<1x192xf32>
    %153 = arith.divf %151, %152 : vector<1x192xf32>
    %154 = vector.extract_strided_slice %147 {offsets = [0, 192], sizes = [1, 64], strides = [1, 1]} : vector<1x256xf32> to vector<1x64xf32>
    %155 = math.tanh %154 : vector<1x64xf32>
    %156 = vector.extract_strided_slice %153 {offsets = [0, 0], sizes = [1, 64], strides = [1, 1]} : vector<1x192xf32> to vector<1x64xf32>
    %157 = vector.extract_strided_slice %153 {offsets = [0, 64], sizes = [1, 64], strides = [1, 1]} : vector<1x192xf32> to vector<1x64xf32>
    %158 = vector.extract_strided_slice %153 {offsets = [0, 128], sizes = [1, 64], strides = [1, 1]} : vector<1x192xf32> to vector<1x64xf32>
    %159 = arith.mulf %157, %136 : vector<1x64xf32>
    %160 = arith.mulf %156, %155 : vector<1x64xf32>
    %161 = arith.addf %159, %160 : vector<1x64xf32>
    %162 = math.tanh %161 : vector<1x64xf32>
    %163 = arith.mulf %158, %162 : vector<1x64xf32>
    %164 = vector.extract_strided_slice %163 {offsets = [0, 0], sizes = [1, 32], strides = [1, 1]} : vector<1x64xf32> to vector<1x32xf32>
    %165 = vector.extract_strided_slice %163 {offsets = [0, 32], sizes = [1, 32], strides = [1, 1]} : vector<1x64xf32> to vector<1x32xf32>
    %166 = vector.extract_strided_slice %34 {offsets = [5, 0], sizes = [1, 256], strides = [1, 1]} : vector<8x256xf32> to vector<1x256xf32>
    %167 = vector.extract_strided_slice %36 {offsets = [2, 0], sizes = [1, 256], strides = [1, 1]} : vector<8x256xf32> to vector<1x256xf32>
    %168 = arith.addf %166, %167 : vector<1x256xf32>
    %c0_38 = arith.constant 0 : index
    %c0_39 = arith.constant 0 : index
    %169 = vector.load %arg4[%c0_38, %c0_39] : memref<64x256xf32, #tpu.memory_space<vmem>>, vector<64x256xf32>
    %cst_40 = arith.constant dense<0.000000e+00> : vector<1x256xf32>
    %170 = tpu.matmul %163, %169, %cst_40 {dimension_numbers = #tpu.dot_dimension_numbers<[1], [0], [0], [1], [0, 0, 1, 1], [], []>} : vector<1x64xf32>, vector<64x256xf32>, vector<1x256xf32> -> vector<1x256xf32>
    %171 = arith.addf %168, %170 : vector<1x256xf32>
    %172 = arith.addf %171, %37 : vector<1x256xf32>
    %173 = vector.extract_strided_slice %172 {offsets = [0, 0], sizes = [1, 192], strides = [1, 1]} : vector<1x256xf32> to vector<1x192xf32>
    %174 = arith.negf %173 : vector<1x192xf32>
    %175 = math.exp %174 : vector<1x192xf32>
    %cst_41 = arith.constant 1.000000e+00 : f32
    %176 = vector.broadcast %cst_41 : f32 to vector<1x192xf32>
    %177 = arith.addf %176, %175 : vector<1x192xf32>
    %178 = arith.divf %176, %177 : vector<1x192xf32>
    %179 = vector.extract_strided_slice %172 {offsets = [0, 192], sizes = [1, 64], strides = [1, 1]} : vector<1x256xf32> to vector<1x64xf32>
    %180 = math.tanh %179 : vector<1x64xf32>
    %181 = vector.extract_strided_slice %178 {offsets = [0, 0], sizes = [1, 64], strides = [1, 1]} : vector<1x192xf32> to vector<1x64xf32>
    %182 = vector.extract_strided_slice %178 {offsets = [0, 64], sizes = [1, 64], strides = [1, 1]} : vector<1x192xf32> to vector<1x64xf32>
    %183 = vector.extract_strided_slice %178 {offsets = [0, 128], sizes = [1, 64], strides = [1, 1]} : vector<1x192xf32> to vector<1x64xf32>
    %184 = arith.mulf %182, %161 : vector<1x64xf32>
    %185 = arith.mulf %181, %180 : vector<1x64xf32>
    %186 = arith.addf %184, %185 : vector<1x64xf32>
    %187 = math.tanh %186 : vector<1x64xf32>
    %188 = arith.mulf %183, %187 : vector<1x64xf32>
    %189 = vector.extract_strided_slice %188 {offsets = [0, 0], sizes = [1, 32], strides = [1, 1]} : vector<1x64xf32> to vector<1x32xf32>
    %190 = vector.extract_strided_slice %188 {offsets = [0, 32], sizes = [1, 32], strides = [1, 1]} : vector<1x64xf32> to vector<1x32xf32>
    %191 = vector.extract_strided_slice %34 {offsets = [6, 0], sizes = [1, 256], strides = [1, 1]} : vector<8x256xf32> to vector<1x256xf32>
    %192 = vector.extract_strided_slice %36 {offsets = [1, 0], sizes = [1, 256], strides = [1, 1]} : vector<8x256xf32> to vector<1x256xf32>
    %193 = arith.addf %191, %192 : vector<1x256xf32>
    %c0_42 = arith.constant 0 : index
    %c0_43 = arith.constant 0 : index
    %194 = vector.load %arg4[%c0_42, %c0_43] : memref<64x256xf32, #tpu.memory_space<vmem>>, vector<64x256xf32>
    %cst_44 = arith.constant dense<0.000000e+00> : vector<1x256xf32>
    %195 = tpu.matmul %188, %194, %cst_44 {dimension_numbers = #tpu.dot_dimension_numbers<[1], [0], [0], [1], [0, 0, 1, 1], [], []>} : vector<1x64xf32>, vector<64x256xf32>, vector<1x256xf32> -> vector<1x256xf32>
    %196 = arith.addf %193, %195 : vector<1x256xf32>
    %197 = arith.addf %196, %37 : vector<1x256xf32>
    %198 = vector.extract_strided_slice %197 {offsets = [0, 0], sizes = [1, 192], strides = [1, 1]} : vector<1x256xf32> to vector<1x192xf32>
    %199 = arith.negf %198 : vector<1x192xf32>
    %200 = math.exp %199 : vector<1x192xf32>
    %cst_45 = arith.constant 1.000000e+00 : f32
    %201 = vector.broadcast %cst_45 : f32 to vector<1x192xf32>
    %202 = arith.addf %201, %200 : vector<1x192xf32>
    %203 = arith.divf %201, %202 : vector<1x192xf32>
    %204 = vector.extract_strided_slice %197 {offsets = [0, 192], sizes = [1, 64], strides = [1, 1]} : vector<1x256xf32> to vector<1x64xf32>
    %205 = math.tanh %204 : vector<1x64xf32>
    %206 = vector.extract_strided_slice %203 {offsets = [0, 0], sizes = [1, 64], strides = [1, 1]} : vector<1x192xf32> to vector<1x64xf32>
    %207 = vector.extract_strided_slice %203 {offsets = [0, 64], sizes = [1, 64], strides = [1, 1]} : vector<1x192xf32> to vector<1x64xf32>
    %208 = vector.extract_strided_slice %203 {offsets = [0, 128], sizes = [1, 64], strides = [1, 1]} : vector<1x192xf32> to vector<1x64xf32>
    %209 = arith.mulf %207, %186 : vector<1x64xf32>
    %210 = arith.mulf %206, %205 : vector<1x64xf32>
    %211 = arith.addf %209, %210 : vector<1x64xf32>
    %212 = math.tanh %211 : vector<1x64xf32>
    %213 = arith.mulf %208, %212 : vector<1x64xf32>
    %214 = vector.extract_strided_slice %213 {offsets = [0, 0], sizes = [1, 32], strides = [1, 1]} : vector<1x64xf32> to vector<1x32xf32>
    %215 = vector.extract_strided_slice %213 {offsets = [0, 32], sizes = [1, 32], strides = [1, 1]} : vector<1x64xf32> to vector<1x32xf32>
    %216 = vector.extract_strided_slice %34 {offsets = [7, 0], sizes = [1, 256], strides = [1, 1]} : vector<8x256xf32> to vector<1x256xf32>
    %217 = vector.extract_strided_slice %36 {offsets = [0, 0], sizes = [1, 256], strides = [1, 1]} : vector<8x256xf32> to vector<1x256xf32>
    %218 = arith.addf %216, %217 : vector<1x256xf32>
    %c0_46 = arith.constant 0 : index
    %c0_47 = arith.constant 0 : index
    %219 = vector.load %arg4[%c0_46, %c0_47] : memref<64x256xf32, #tpu.memory_space<vmem>>, vector<64x256xf32>
    %cst_48 = arith.constant dense<0.000000e+00> : vector<1x256xf32>
    %220 = tpu.matmul %213, %219, %cst_48 {dimension_numbers = #tpu.dot_dimension_numbers<[1], [0], [0], [1], [0, 0, 1, 1], [], []>} : vector<1x64xf32>, vector<64x256xf32>, vector<1x256xf32> -> vector<1x256xf32>
    %221 = arith.addf %218, %220 : vector<1x256xf32>
    %222 = arith.addf %221, %37 : vector<1x256xf32>
    %223 = vector.extract_strided_slice %222 {offsets = [0, 0], sizes = [1, 192], strides = [1, 1]} : vector<1x256xf32> to vector<1x192xf32>
    %224 = arith.negf %223 : vector<1x192xf32>
    %225 = math.exp %224 : vector<1x192xf32>
    %cst_49 = arith.constant 1.000000e+00 : f32
    %226 = vector.broadcast %cst_49 : f32 to vector<1x192xf32>
    %227 = arith.addf %226, %225 : vector<1x192xf32>
    %228 = arith.divf %226, %227 : vector<1x192xf32>
    %229 = vector.extract_strided_slice %222 {offsets = [0, 192], sizes = [1, 64], strides = [1, 1]} : vector<1x256xf32> to vector<1x64xf32>
    %230 = math.tanh %229 : vector<1x64xf32>
    %231 = vector.extract_strided_slice %228 {offsets = [0, 0], sizes = [1, 64], strides = [1, 1]} : vector<1x192xf32> to vector<1x64xf32>
    %232 = vector.extract_strided_slice %228 {offsets = [0, 64], sizes = [1, 64], strides = [1, 1]} : vector<1x192xf32> to vector<1x64xf32>
    %233 = vector.extract_strided_slice %228 {offsets = [0, 128], sizes = [1, 64], strides = [1, 1]} : vector<1x192xf32> to vector<1x64xf32>
    %234 = arith.mulf %232, %211 : vector<1x64xf32>
    %235 = arith.mulf %231, %230 : vector<1x64xf32>
    %236 = arith.addf %234, %235 : vector<1x64xf32>
    %237 = math.tanh %236 : vector<1x64xf32>
    %238 = arith.mulf %233, %237 : vector<1x64xf32>
    %239 = vector.extract_strided_slice %238 {offsets = [0, 0], sizes = [1, 32], strides = [1, 1]} : vector<1x64xf32> to vector<1x32xf32>
    %240 = vector.extract_strided_slice %238 {offsets = [0, 32], sizes = [1, 32], strides = [1, 1]} : vector<1x64xf32> to vector<1x32xf32>
    %241 = tpu.concatenate %64, %89, %114, %139, %164, %189, %214, %239 in 0 : vector<1x32xf32>, vector<1x32xf32>, vector<1x32xf32>, vector<1x32xf32>, vector<1x32xf32>, vector<1x32xf32>, vector<1x32xf32>, vector<1x32xf32> -> vector<8x32xf32>
    %242 = tpu.concatenate %240, %215, %190, %165, %140, %115, %90, %65 in 0 : vector<1x32xf32>, vector<1x32xf32>, vector<1x32xf32>, vector<1x32xf32>, vector<1x32xf32>, vector<1x32xf32>, vector<1x32xf32>, vector<1x32xf32> -> vector<8x32xf32>
    %c0_50 = arith.constant 0 : index
    %c0_51 = arith.constant 0 : index
    %243 = vector.load %arg6[%c0_50, %c0_51] : memref<64x5xf32, #tpu.memory_space<vmem>>, vector<32x5xf32>
    %cst_52 = arith.constant dense<0.000000e+00> : vector<8x5xf32>
    %244 = tpu.matmul %241, %243, %cst_52 {dimension_numbers = #tpu.dot_dimension_numbers<[1], [0], [0], [1], [0, 0, 1, 1], [], []>} : vector<8x32xf32>, vector<32x5xf32>, vector<8x5xf32> -> vector<8x5xf32>
    %c32 = arith.constant 32 : index
    %c0_53 = arith.constant 0 : index
    %245 = vector.load %arg6[%c32, %c0_53] : memref<64x5xf32, #tpu.memory_space<vmem>>, vector<32x5xf32>
    %cst_54 = arith.constant dense<0.000000e+00> : vector<8x5xf32>
    %246 = tpu.matmul %242, %245, %cst_54 {dimension_numbers = #tpu.dot_dimension_numbers<[1], [0], [0], [1], [0, 0, 1, 1], [], []>} : vector<8x32xf32>, vector<32x5xf32>, vector<8x5xf32> -> vector<8x5xf32>
    %247 = arith.addf %244, %246 : vector<8x5xf32>
    %248 = vector.broadcast %38 : vector<1x5xf32> to vector<8x5xf32>
    %249 = arith.addf %247, %248 : vector<8x5xf32>
    %cst_55 = arith.constant dense<0xFF800000> : vector<8xf32>
    %250 = vector.multi_reduction <maximumf>, %249, %cst_55 [1] : vector<8x5xf32> to vector<8xf32>
    %251 = vector.shape_cast %250 : vector<8xf32> to vector<8x1xf32>
    %252 = vector.broadcast %251 : vector<8x1xf32> to vector<8x5xf32>
    %253 = arith.subf %249, %252 : vector<8x5xf32>
    %254 = math.exp %253 : vector<8x5xf32>
    %cst_56 = arith.constant dense<0.000000e+00> : vector<8xf32>
    %255 = vector.multi_reduction <add>, %254, %cst_56 [1] : vector<8x5xf32> to vector<8xf32>
    %256 = vector.shape_cast %255 : vector<8xf32> to vector<8x1xf32>
    %257 = math.log %256 : vector<8x1xf32>
    %258 = vector.broadcast %257 : vector<8x1xf32> to vector<8x5xf32>
    %259 = arith.subf %253, %258 : vector<8x5xf32>
    %260 = tpu.iota {dimensions = array<i32: 0>} : vector<5x1xi32>
    %261 = tpu.iota {dimensions = array<i32: 0>} : vector<5x5xi32>
    %262 = tpu.iota {dimensions = array<i32: 1>} : vector<5x5xi32>
    %263 = arith.cmpi eq, %261, %262 : vector<5x5xi32>
    %c3_i32 = arith.constant 3 : i32
    %264 = vector.broadcast %c3_i32 : i32 to vector<5x1xi32>
    %265 = arith.cmpi eq, %260, %264 : vector<5x1xi32>
    %cst_57 = arith.constant 0.000000e+00 : f32
    %cst_58 = arith.constant -1.000000e+04 : f32
    %266 = vector.broadcast %cst_57 : f32 to vector<5x1xf32>
    %267 = vector.broadcast %cst_58 : f32 to vector<5x1xf32>
    %268 = arith.select %265, %266, %267 : vector<5x1xi1>, vector<5x1xf32>
    %c0_59 = arith.constant 0 : index
    %c0_60 = arith.constant 0 : index
    %269 = vector.load %arg7[%c0_59, %c0_60] : memref<5x5xf32, #tpu.memory_space<vmem>>, vector<5x5xf32>
    %270 = vector.broadcast %268 : vector<5x1xf32> to vector<5x5xf32>
    %271 = arith.addf %270, %269 : vector<5x5xf32>
    %cst_61 = arith.constant dense<0xFF800000> : vector<5xf32>
    %272 = vector.multi_reduction <maximumf>, %271, %cst_61 [0] : vector<5x5xf32> to vector<5xf32>
    %273 = vector.shape_cast %272 : vector<5xf32> to vector<1x5xf32>
    %274 = vector.extract_strided_slice %259 {offsets = [0, 0], sizes = [1, 5], strides = [1, 1]} : vector<8x5xf32> to vector<1x5xf32>
    %275 = arith.addf %273, %274 : vector<1x5xf32>
    %cst_62 = arith.constant 0.000000e+00 : f32
    %276 = vector.shape_cast %275 : vector<1x5xf32> to vector<1x5xf32>
    %277 = vector.broadcast %276 : vector<1x5xf32> to vector<5x5xf32>
    %278 = vector.broadcast %cst_62 : f32 to vector<5x5xf32>
    %279 = arith.select %263, %277, %278 : vector<5x5xi1>, vector<5x5xf32>
    %cst_63 = arith.constant dense<0.000000e+00> : vector<5xf32>
    %280 = vector.multi_reduction <add>, %279, %cst_63 [1] : vector<5x5xf32> to vector<5xf32>
    %281 = vector.shape_cast %280 : vector<5xf32> to vector<5x1xf32>
    %c0_64 = arith.constant 0 : index
    %c0_65 = arith.constant 0 : index
    %282 = vector.load %arg7[%c0_64, %c0_65] : memref<5x5xf32, #tpu.memory_space<vmem>>, vector<5x5xf32>
    %283 = vector.broadcast %281 : vector<5x1xf32> to vector<5x5xf32>
    %284 = arith.addf %283, %282 : vector<5x5xf32>
    %cst_66 = arith.constant dense<0xFF800000> : vector<5xf32>
    %285 = vector.multi_reduction <maximumf>, %284, %cst_66 [0] : vector<5x5xf32> to vector<5xf32>
    %286 = vector.shape_cast %285 : vector<5xf32> to vector<1x5xf32>
    %287 = vector.broadcast %286 : vector<1x5xf32> to vector<5x5xf32>
    %288 = arith.cmpf oeq, %284, %287 : vector<5x5xf32>
    %c5_i32 = arith.constant 5 : i32
    %289 = vector.broadcast %c5_i32 : i32 to vector<5x5xi32>
    %290 = arith.select %288, %261, %289 : vector<5x5xi1>, vector<5x5xi32>
    %cst_67 = arith.constant dense<2147483647> : vector<5xi32>
    %291 = vector.multi_reduction <minsi>, %290, %cst_67 [0] : vector<5x5xi32> to vector<5xi32>
    %292 = vector.shape_cast %291 : vector<5xi32> to vector<1x5xi32>
    %293 = vector.extract_strided_slice %259 {offsets = [1, 0], sizes = [1, 5], strides = [1, 1]} : vector<8x5xf32> to vector<1x5xf32>
    %294 = arith.addf %286, %293 : vector<1x5xf32>
    %cst_68 = arith.constant 0.000000e+00 : f32
    %295 = vector.shape_cast %294 : vector<1x5xf32> to vector<1x5xf32>
    %296 = vector.broadcast %295 : vector<1x5xf32> to vector<5x5xf32>
    %297 = vector.broadcast %cst_68 : f32 to vector<5x5xf32>
    %298 = arith.select %263, %296, %297 : vector<5x5xi1>, vector<5x5xf32>
    %cst_69 = arith.constant dense<0.000000e+00> : vector<5xf32>
    %299 = vector.multi_reduction <add>, %298, %cst_69 [1] : vector<5x5xf32> to vector<5xf32>
    %300 = vector.shape_cast %299 : vector<5xf32> to vector<5x1xf32>
    %c0_70 = arith.constant 0 : index
    %c0_71 = arith.constant 0 : index
    %301 = vector.load %arg7[%c0_70, %c0_71] : memref<5x5xf32, #tpu.memory_space<vmem>>, vector<5x5xf32>
    %302 = vector.broadcast %300 : vector<5x1xf32> to vector<5x5xf32>
    %303 = arith.addf %302, %301 : vector<5x5xf32>
    %cst_72 = arith.constant dense<0xFF800000> : vector<5xf32>
    %304 = vector.multi_reduction <maximumf>, %303, %cst_72 [0] : vector<5x5xf32> to vector<5xf32>
    %305 = vector.shape_cast %304 : vector<5xf32> to vector<1x5xf32>
    %306 = vector.broadcast %305 : vector<1x5xf32> to vector<5x5xf32>
    %307 = arith.cmpf oeq, %303, %306 : vector<5x5xf32>
    %c5_i32_73 = arith.constant 5 : i32
    %308 = vector.broadcast %c5_i32_73 : i32 to vector<5x5xi32>
    %309 = arith.select %307, %261, %308 : vector<5x5xi1>, vector<5x5xi32>
    %cst_74 = arith.constant dense<2147483647> : vector<5xi32>
    %310 = vector.multi_reduction <minsi>, %309, %cst_74 [0] : vector<5x5xi32> to vector<5xi32>
    %311 = vector.shape_cast %310 : vector<5xi32> to vector<1x5xi32>
    %312 = vector.extract_strided_slice %259 {offsets = [2, 0], sizes = [1, 5], strides = [1, 1]} : vector<8x5xf32> to vector<1x5xf32>
    %313 = arith.addf %305, %312 : vector<1x5xf32>
    %cst_75 = arith.constant 0.000000e+00 : f32
    %314 = vector.shape_cast %313 : vector<1x5xf32> to vector<1x5xf32>
    %315 = vector.broadcast %314 : vector<1x5xf32> to vector<5x5xf32>
    %316 = vector.broadcast %cst_75 : f32 to vector<5x5xf32>
    %317 = arith.select %263, %315, %316 : vector<5x5xi1>, vector<5x5xf32>
    %cst_76 = arith.constant dense<0.000000e+00> : vector<5xf32>
    %318 = vector.multi_reduction <add>, %317, %cst_76 [1] : vector<5x5xf32> to vector<5xf32>
    %319 = vector.shape_cast %318 : vector<5xf32> to vector<5x1xf32>
    %c0_77 = arith.constant 0 : index
    %c0_78 = arith.constant 0 : index
    %320 = vector.load %arg7[%c0_77, %c0_78] : memref<5x5xf32, #tpu.memory_space<vmem>>, vector<5x5xf32>
    %321 = vector.broadcast %319 : vector<5x1xf32> to vector<5x5xf32>
    %322 = arith.addf %321, %320 : vector<5x5xf32>
    %cst_79 = arith.constant dense<0xFF800000> : vector<5xf32>
    %323 = vector.multi_reduction <maximumf>, %322, %cst_79 [0] : vector<5x5xf32> to vector<5xf32>
    %324 = vector.shape_cast %323 : vector<5xf32> to vector<1x5xf32>
    %325 = vector.broadcast %324 : vector<1x5xf32> to vector<5x5xf32>
    %326 = arith.cmpf oeq, %322, %325 : vector<5x5xf32>
    %c5_i32_80 = arith.constant 5 : i32
    %327 = vector.broadcast %c5_i32_80 : i32 to vector<5x5xi32>
    %328 = arith.select %326, %261, %327 : vector<5x5xi1>, vector<5x5xi32>
    %cst_81 = arith.constant dense<2147483647> : vector<5xi32>
    %329 = vector.multi_reduction <minsi>, %328, %cst_81 [0] : vector<5x5xi32> to vector<5xi32>
    %330 = vector.shape_cast %329 : vector<5xi32> to vector<1x5xi32>
    %331 = vector.extract_strided_slice %259 {offsets = [3, 0], sizes = [1, 5], strides = [1, 1]} : vector<8x5xf32> to vector<1x5xf32>
    %332 = arith.addf %324, %331 : vector<1x5xf32>
    %cst_82 = arith.constant 0.000000e+00 : f32
    %333 = vector.shape_cast %332 : vector<1x5xf32> to vector<1x5xf32>
    %334 = vector.broadcast %333 : vector<1x5xf32> to vector<5x5xf32>
    %335 = vector.broadcast %cst_82 : f32 to vector<5x5xf32>
    %336 = arith.select %263, %334, %335 : vector<5x5xi1>, vector<5x5xf32>
    %cst_83 = arith.constant dense<0.000000e+00> : vector<5xf32>
    %337 = vector.multi_reduction <add>, %336, %cst_83 [1] : vector<5x5xf32> to vector<5xf32>
    %338 = vector.shape_cast %337 : vector<5xf32> to vector<5x1xf32>
    %c0_84 = arith.constant 0 : index
    %c0_85 = arith.constant 0 : index
    %339 = vector.load %arg7[%c0_84, %c0_85] : memref<5x5xf32, #tpu.memory_space<vmem>>, vector<5x5xf32>
    %340 = vector.broadcast %338 : vector<5x1xf32> to vector<5x5xf32>
    %341 = arith.addf %340, %339 : vector<5x5xf32>
    %cst_86 = arith.constant dense<0xFF800000> : vector<5xf32>
    %342 = vector.multi_reduction <maximumf>, %341, %cst_86 [0] : vector<5x5xf32> to vector<5xf32>
    %343 = vector.shape_cast %342 : vector<5xf32> to vector<1x5xf32>
    %344 = vector.broadcast %343 : vector<1x5xf32> to vector<5x5xf32>
    %345 = arith.cmpf oeq, %341, %344 : vector<5x5xf32>
    %c5_i32_87 = arith.constant 5 : i32
    %346 = vector.broadcast %c5_i32_87 : i32 to vector<5x5xi32>
    %347 = arith.select %345, %261, %346 : vector<5x5xi1>, vector<5x5xi32>
    %cst_88 = arith.constant dense<2147483647> : vector<5xi32>
    %348 = vector.multi_reduction <minsi>, %347, %cst_88 [0] : vector<5x5xi32> to vector<5xi32>
    %349 = vector.shape_cast %348 : vector<5xi32> to vector<1x5xi32>
    %350 = vector.extract_strided_slice %259 {offsets = [4, 0], sizes = [1, 5], strides = [1, 1]} : vector<8x5xf32> to vector<1x5xf32>
    %351 = arith.addf %343, %350 : vector<1x5xf32>
    %cst_89 = arith.constant 0.000000e+00 : f32
    %352 = vector.shape_cast %351 : vector<1x5xf32> to vector<1x5xf32>
    %353 = vector.broadcast %352 : vector<1x5xf32> to vector<5x5xf32>
    %354 = vector.broadcast %cst_89 : f32 to vector<5x5xf32>
    %355 = arith.select %263, %353, %354 : vector<5x5xi1>, vector<5x5xf32>
    %cst_90 = arith.constant dense<0.000000e+00> : vector<5xf32>
    %356 = vector.multi_reduction <add>, %355, %cst_90 [1] : vector<5x5xf32> to vector<5xf32>
    %357 = vector.shape_cast %356 : vector<5xf32> to vector<5x1xf32>
    %c0_91 = arith.constant 0 : index
    %c0_92 = arith.constant 0 : index
    %358 = vector.load %arg7[%c0_91, %c0_92] : memref<5x5xf32, #tpu.memory_space<vmem>>, vector<5x5xf32>
    %359 = vector.broadcast %357 : vector<5x1xf32> to vector<5x5xf32>
    %360 = arith.addf %359, %358 : vector<5x5xf32>
    %cst_93 = arith.constant dense<0xFF800000> : vector<5xf32>
    %361 = vector.multi_reduction <maximumf>, %360, %cst_93 [0] : vector<5x5xf32> to vector<5xf32>
    %362 = vector.shape_cast %361 : vector<5xf32> to vector<1x5xf32>
    %363 = vector.broadcast %362 : vector<1x5xf32> to vector<5x5xf32>
    %364 = arith.cmpf oeq, %360, %363 : vector<5x5xf32>
    %c5_i32_94 = arith.constant 5 : i32
    %365 = vector.broadcast %c5_i32_94 : i32 to vector<5x5xi32>
    %366 = arith.select %364, %261, %365 : vector<5x5xi1>, vector<5x5xi32>
    %cst_95 = arith.constant dense<2147483647> : vector<5xi32>
    %367 = vector.multi_reduction <minsi>, %366, %cst_95 [0] : vector<5x5xi32> to vector<5xi32>
    %368 = vector.shape_cast %367 : vector<5xi32> to vector<1x5xi32>
    %369 = vector.extract_strided_slice %259 {offsets = [5, 0], sizes = [1, 5], strides = [1, 1]} : vector<8x5xf32> to vector<1x5xf32>
    %370 = arith.addf %362, %369 : vector<1x5xf32>
    %cst_96 = arith.constant 0.000000e+00 : f32
    %371 = vector.shape_cast %370 : vector<1x5xf32> to vector<1x5xf32>
    %372 = vector.broadcast %371 : vector<1x5xf32> to vector<5x5xf32>
    %373 = vector.broadcast %cst_96 : f32 to vector<5x5xf32>
    %374 = arith.select %263, %372, %373 : vector<5x5xi1>, vector<5x5xf32>
    %cst_97 = arith.constant dense<0.000000e+00> : vector<5xf32>
    %375 = vector.multi_reduction <add>, %374, %cst_97 [1] : vector<5x5xf32> to vector<5xf32>
    %376 = vector.shape_cast %375 : vector<5xf32> to vector<5x1xf32>
    %c0_98 = arith.constant 0 : index
    %c0_99 = arith.constant 0 : index
    %377 = vector.load %arg7[%c0_98, %c0_99] : memref<5x5xf32, #tpu.memory_space<vmem>>, vector<5x5xf32>
    %378 = vector.broadcast %376 : vector<5x1xf32> to vector<5x5xf32>
    %379 = arith.addf %378, %377 : vector<5x5xf32>
    %cst_100 = arith.constant dense<0xFF800000> : vector<5xf32>
    %380 = vector.multi_reduction <maximumf>, %379, %cst_100 [0] : vector<5x5xf32> to vector<5xf32>
    %381 = vector.shape_cast %380 : vector<5xf32> to vector<1x5xf32>
    %382 = vector.broadcast %381 : vector<1x5xf32> to vector<5x5xf32>
    %383 = arith.cmpf oeq, %379, %382 : vector<5x5xf32>
    %c5_i32_101 = arith.constant 5 : i32
    %384 = vector.broadcast %c5_i32_101 : i32 to vector<5x5xi32>
    %385 = arith.select %383, %261, %384 : vector<5x5xi1>, vector<5x5xi32>
    %cst_102 = arith.constant dense<2147483647> : vector<5xi32>
    %386 = vector.multi_reduction <minsi>, %385, %cst_102 [0] : vector<5x5xi32> to vector<5xi32>
    %387 = vector.shape_cast %386 : vector<5xi32> to vector<1x5xi32>
    %388 = vector.extract_strided_slice %259 {offsets = [6, 0], sizes = [1, 5], strides = [1, 1]} : vector<8x5xf32> to vector<1x5xf32>
    %389 = arith.addf %381, %388 : vector<1x5xf32>
    %cst_103 = arith.constant 0.000000e+00 : f32
    %390 = vector.shape_cast %389 : vector<1x5xf32> to vector<1x5xf32>
    %391 = vector.broadcast %390 : vector<1x5xf32> to vector<5x5xf32>
    %392 = vector.broadcast %cst_103 : f32 to vector<5x5xf32>
    %393 = arith.select %263, %391, %392 : vector<5x5xi1>, vector<5x5xf32>
    %cst_104 = arith.constant dense<0.000000e+00> : vector<5xf32>
    %394 = vector.multi_reduction <add>, %393, %cst_104 [1] : vector<5x5xf32> to vector<5xf32>
    %395 = vector.shape_cast %394 : vector<5xf32> to vector<5x1xf32>
    %c0_105 = arith.constant 0 : index
    %c0_106 = arith.constant 0 : index
    %396 = vector.load %arg7[%c0_105, %c0_106] : memref<5x5xf32, #tpu.memory_space<vmem>>, vector<5x5xf32>
    %397 = vector.broadcast %395 : vector<5x1xf32> to vector<5x5xf32>
    %398 = arith.addf %397, %396 : vector<5x5xf32>
    %cst_107 = arith.constant dense<0xFF800000> : vector<5xf32>
    %399 = vector.multi_reduction <maximumf>, %398, %cst_107 [0] : vector<5x5xf32> to vector<5xf32>
    %400 = vector.shape_cast %399 : vector<5xf32> to vector<1x5xf32>
    %401 = vector.broadcast %400 : vector<1x5xf32> to vector<5x5xf32>
    %402 = arith.cmpf oeq, %398, %401 : vector<5x5xf32>
    %c5_i32_108 = arith.constant 5 : i32
    %403 = vector.broadcast %c5_i32_108 : i32 to vector<5x5xi32>
    %404 = arith.select %402, %261, %403 : vector<5x5xi1>, vector<5x5xi32>
    %cst_109 = arith.constant dense<2147483647> : vector<5xi32>
    %405 = vector.multi_reduction <minsi>, %404, %cst_109 [0] : vector<5x5xi32> to vector<5xi32>
    %406 = vector.shape_cast %405 : vector<5xi32> to vector<1x5xi32>
    %407 = vector.extract_strided_slice %259 {offsets = [7, 0], sizes = [1, 5], strides = [1, 1]} : vector<8x5xf32> to vector<1x5xf32>
    %408 = arith.addf %400, %407 : vector<1x5xf32>
    %cst_110 = arith.constant 0.000000e+00 : f32
    %409 = vector.shape_cast %408 : vector<1x5xf32> to vector<1x5xf32>
    %410 = vector.broadcast %409 : vector<1x5xf32> to vector<5x5xf32>
    %411 = vector.broadcast %cst_110 : f32 to vector<5x5xf32>
    %412 = arith.select %263, %410, %411 : vector<5x5xi1>, vector<5x5xf32>
    %cst_111 = arith.constant dense<0.000000e+00> : vector<5xf32>
    %413 = vector.multi_reduction <add>, %412, %cst_111 [1] : vector<5x5xf32> to vector<5xf32>
    %414 = vector.shape_cast %413 : vector<5xf32> to vector<5x1xf32>
    %c0_112 = arith.constant 0 : index
    %c4_113 = arith.constant 4 : index
    %415 = vector.load %arg7[%c0_112, %c4_113] : memref<5x5xf32, #tpu.memory_space<vmem>>, vector<5x1xf32>
    %416 = arith.addf %414, %415 : vector<5x1xf32>
    %cst_114 = arith.constant dense<0xFF800000> : vector<1xf32>
    %417 = vector.multi_reduction <maximumf>, %416, %cst_114 [0] : vector<5x1xf32> to vector<1xf32>
    %418 = vector.shape_cast %417 : vector<1xf32> to vector<1x1xf32>
    %419 = vector.broadcast %418 : vector<1x1xf32> to vector<5x1xf32>
    %420 = arith.cmpf oeq, %416, %419 : vector<5x1xf32>
    %c5_i32_115 = arith.constant 5 : i32
    %421 = vector.broadcast %c5_i32_115 : i32 to vector<5x1xi32>
    %422 = arith.select %420, %260, %421 : vector<5x1xi1>, vector<5x1xi32>
    %cst_116 = arith.constant dense<2147483647> : vector<1xi32>
    %423 = vector.multi_reduction <minsi>, %422, %cst_116 [0] : vector<5x1xi32> to vector<1xi32>
    %424 = vector.shape_cast %423 : vector<1xi32> to vector<1x1xi32>
    %c0_117 = arith.constant 0 : index
    %c0_118 = arith.constant 0 : index
    %c0_119 = arith.constant 0 : index
    %425 = vector.load %arg8[%c0_117, %c0_118, %c0_119] : memref<1x1x1xf32, #tpu.memory_space<vmem>>, vector<1x1x1xf32>
    %426 = vector.shape_cast %425 : vector<1x1x1xf32> to vector<1x1xf32>
    %427 = vector.shape_cast %418 : vector<1x1xf32> to vector<1x1x1xf32>
    tpu.vector_store %arg8[%c0_117, %c0_118, %c0_119], %427 {strides = array<i32>} : memref<1x1x1xf32, #tpu.memory_space<vmem>>, vector<1x1x1xf32>,
    %428 = tpu.iota {dimensions = array<i32: 1>} : vector<1x5xi32>
    %429 = tpu.iota {dimensions = array<i32: 1>} : vector<1x8xi32>
    %c7_i32 = arith.constant 7 : i32
    %430 = vector.broadcast %c7_i32 : i32 to vector<1x8xi32>
    %431 = arith.cmpi eq, %429, %430 : vector<1x8xi32>
    %c0_i32 = arith.constant 0 : i32
    %432 = vector.broadcast %c0_i32 : i32 to vector<1x8xi32>
    %433 = vector.shape_cast %424 : vector<1x1xi32> to vector<1x1xi32>
    %434 = vector.broadcast %433 : vector<1x1xi32> to vector<1x8xi32>
    %435 = arith.select %431, %434, %432 : vector<1x8xi1>, vector<1x8xi32>
    %436 = vector.broadcast %424 : vector<1x1xi32> to vector<1x5xi32>
    %437 = arith.cmpi eq, %428, %436 : vector<1x5xi32>
    %c0_i32_120 = arith.constant 0 : i32
    %438 = vector.broadcast %c0_i32_120 : i32 to vector<1x5xi32>
    %439 = arith.select %437, %406, %438 : vector<1x5xi1>, vector<1x5xi32>
    %cst_121 = arith.constant dense<0> : vector<1xi32>
    %440 = vector.multi_reduction <add>, %439, %cst_121 [1] : vector<1x5xi32> to vector<1xi32>
    %441 = vector.shape_cast %440 : vector<1xi32> to vector<1x1xi32>
    %c6_i32 = arith.constant 6 : i32
    %442 = vector.broadcast %c6_i32 : i32 to vector<1x8xi32>
    %443 = arith.cmpi eq, %429, %442 : vector<1x8xi32>
    %444 = vector.shape_cast %441 : vector<1x1xi32> to vector<1x1xi32>
    %445 = vector.broadcast %444 : vector<1x1xi32> to vector<1x8xi32>
    %446 = arith.select %443, %445, %435 : vector<1x8xi1>, vector<1x8xi32>
    %447 = vector.broadcast %441 : vector<1x1xi32> to vector<1x5xi32>
    %448 = arith.cmpi eq, %428, %447 : vector<1x5xi32>
    %c0_i32_122 = arith.constant 0 : i32
    %449 = vector.broadcast %c0_i32_122 : i32 to vector<1x5xi32>
    %450 = arith.select %448, %387, %449 : vector<1x5xi1>, vector<1x5xi32>
    %cst_123 = arith.constant dense<0> : vector<1xi32>
    %451 = vector.multi_reduction <add>, %450, %cst_123 [1] : vector<1x5xi32> to vector<1xi32>
    %452 = vector.shape_cast %451 : vector<1xi32> to vector<1x1xi32>
    %c5_i32_124 = arith.constant 5 : i32
    %453 = vector.broadcast %c5_i32_124 : i32 to vector<1x8xi32>
    %454 = arith.cmpi eq, %429, %453 : vector<1x8xi32>
    %455 = vector.shape_cast %452 : vector<1x1xi32> to vector<1x1xi32>
    %456 = vector.broadcast %455 : vector<1x1xi32> to vector<1x8xi32>
    %457 = arith.select %454, %456, %446 : vector<1x8xi1>, vector<1x8xi32>
    %458 = vector.broadcast %452 : vector<1x1xi32> to vector<1x5xi32>
    %459 = arith.cmpi eq, %428, %458 : vector<1x5xi32>
    %c0_i32_125 = arith.constant 0 : i32
    %460 = vector.broadcast %c0_i32_125 : i32 to vector<1x5xi32>
    %461 = arith.select %459, %368, %460 : vector<1x5xi1>, vector<1x5xi32>
    %cst_126 = arith.constant dense<0> : vector<1xi32>
    %462 = vector.multi_reduction <add>, %461, %cst_126 [1] : vector<1x5xi32> to vector<1xi32>
    %463 = vector.shape_cast %462 : vector<1xi32> to vector<1x1xi32>
    %c4_i32 = arith.constant 4 : i32
    %464 = vector.broadcast %c4_i32 : i32 to vector<1x8xi32>
    %465 = arith.cmpi eq, %429, %464 : vector<1x8xi32>
    %466 = vector.shape_cast %463 : vector<1x1xi32> to vector<1x1xi32>
    %467 = vector.broadcast %466 : vector<1x1xi32> to vector<1x8xi32>
    %468 = arith.select %465, %467, %457 : vector<1x8xi1>, vector<1x8xi32>
    %469 = vector.broadcast %463 : vector<1x1xi32> to vector<1x5xi32>
    %470 = arith.cmpi eq, %428, %469 : vector<1x5xi32>
    %c0_i32_127 = arith.constant 0 : i32
    %471 = vector.broadcast %c0_i32_127 : i32 to vector<1x5xi32>
    %472 = arith.select %470, %349, %471 : vector<1x5xi1>, vector<1x5xi32>
    %cst_128 = arith.constant dense<0> : vector<1xi32>
    %473 = vector.multi_reduction <add>, %472, %cst_128 [1] : vector<1x5xi32> to vector<1xi32>
    %474 = vector.shape_cast %473 : vector<1xi32> to vector<1x1xi32>
    %c3_i32_129 = arith.constant 3 : i32
    %475 = vector.broadcast %c3_i32_129 : i32 to vector<1x8xi32>
    %476 = arith.cmpi eq, %429, %475 : vector<1x8xi32>
    %477 = vector.shape_cast %474 : vector<1x1xi32> to vector<1x1xi32>
    %478 = vector.broadcast %477 : vector<1x1xi32> to vector<1x8xi32>
    %479 = arith.select %476, %478, %468 : vector<1x8xi1>, vector<1x8xi32>
    %480 = vector.broadcast %474 : vector<1x1xi32> to vector<1x5xi32>
    %481 = arith.cmpi eq, %428, %480 : vector<1x5xi32>
    %c0_i32_130 = arith.constant 0 : i32
    %482 = vector.broadcast %c0_i32_130 : i32 to vector<1x5xi32>
    %483 = arith.select %481, %330, %482 : vector<1x5xi1>, vector<1x5xi32>
    %cst_131 = arith.constant dense<0> : vector<1xi32>
    %484 = vector.multi_reduction <add>, %483, %cst_131 [1] : vector<1x5xi32> to vector<1xi32>
    %485 = vector.shape_cast %484 : vector<1xi32> to vector<1x1xi32>
    %c2_i32 = arith.constant 2 : i32
    %486 = vector.broadcast %c2_i32 : i32 to vector<1x8xi32>
    %487 = arith.cmpi eq, %429, %486 : vector<1x8xi32>
    %488 = vector.shape_cast %485 : vector<1x1xi32> to vector<1x1xi32>
    %489 = vector.broadcast %488 : vector<1x1xi32> to vector<1x8xi32>
    %490 = arith.select %487, %489, %479 : vector<1x8xi1>, vector<1x8xi32>
    %491 = vector.broadcast %485 : vector<1x1xi32> to vector<1x5xi32>
    %492 = arith.cmpi eq, %428, %491 : vector<1x5xi32>
    %c0_i32_132 = arith.constant 0 : i32
    %493 = vector.broadcast %c0_i32_132 : i32 to vector<1x5xi32>
    %494 = arith.select %492, %311, %493 : vector<1x5xi1>, vector<1x5xi32>
    %cst_133 = arith.constant dense<0> : vector<1xi32>
    %495 = vector.multi_reduction <add>, %494, %cst_133 [1] : vector<1x5xi32> to vector<1xi32>
    %496 = vector.shape_cast %495 : vector<1xi32> to vector<1x1xi32>
    %c1_i32 = arith.constant 1 : i32
    %497 = vector.broadcast %c1_i32 : i32 to vector<1x8xi32>
    %498 = arith.cmpi eq, %429, %497 : vector<1x8xi32>
    %499 = vector.shape_cast %496 : vector<1x1xi32> to vector<1x1xi32>
    %500 = vector.broadcast %499 : vector<1x1xi32> to vector<1x8xi32>
    %501 = arith.select %498, %500, %490 : vector<1x8xi1>, vector<1x8xi32>
    %502 = vector.broadcast %496 : vector<1x1xi32> to vector<1x5xi32>
    %503 = arith.cmpi eq, %428, %502 : vector<1x5xi32>
    %c0_i32_134 = arith.constant 0 : i32
    %504 = vector.broadcast %c0_i32_134 : i32 to vector<1x5xi32>
    %505 = arith.select %503, %292, %504 : vector<1x5xi1>, vector<1x5xi32>
    %cst_135 = arith.constant dense<0> : vector<1xi32>
    %506 = vector.multi_reduction <add>, %505, %cst_135 [1] : vector<1x5xi32> to vector<1xi32>
    %507 = vector.shape_cast %506 : vector<1xi32> to vector<1x1xi32>
    %c0_i32_136 = arith.constant 0 : i32
    %508 = vector.broadcast %c0_i32_136 : i32 to vector<1x8xi32>
    %509 = arith.cmpi eq, %429, %508 : vector<1x8xi32>
    %510 = vector.shape_cast %507 : vector<1x1xi32> to vector<1x1xi32>
    %511 = vector.broadcast %510 : vector<1x1xi32> to vector<1x8xi32>
    %512 = arith.select %509, %511, %501 : vector<1x8xi1>, vector<1x8xi32>
    %c0_137 = arith.constant 0 : index
    %c0_138 = arith.constant 0 : index
    %c0_139 = arith.constant 0 : index
    %513 = vector.load %arg9[%c0_137, %c0_138, %c0_139] : memref<1x1x8xi32, #tpu.memory_space<vmem>>, vector<1x1x8xi32>
    %514 = vector.shape_cast %513 : vector<1x1x8xi32> to vector<1x8xi32>
    %515 = vector.shape_cast %512 : vector<1x8xi32> to vector<1x1x8xi32>
    tpu.vector_store %arg9[%c0_137, %c0_138, %c0_139], %515 {strides = array<i32>} : memref<1x1x8xi32, #tpu.memory_space<vmem>>, vector<1x1x8xi32>,
    return
  }
  func.func @transform_0(%arg0: i32, %arg1: memref<2x8xi32, #tpu.memory_space<smem>>) -> (i32, i32) {
    %c0_i32 = arith.constant 0 : i32
    %c0_i32_0 = arith.constant 0 : i32
    %c0_i32_1 = arith.constant 0 : i32
    return %c0_i32, %c0_i32_0 : i32, i32
  }
  func.func @transform_1(%arg0: i32, %arg1: memref<2x8xi32, #tpu.memory_space<smem>>) -> (i32, i32) {
    %c0_i32 = arith.constant 0 : i32
    %c0_i32_0 = arith.constant 0 : i32
    %c0_i32_1 = arith.constant 0 : i32
    return %c0_i32, %c0_i32_0 : i32, i32
  }
  func.func @transform_2(%arg0: i32, %arg1: memref<2x8xi32, #tpu.memory_space<smem>>) -> (i32, i32) {
    %c0_i32 = arith.constant 0 : i32
    %c0_i32_0 = arith.constant 0 : i32
    %c0_i32_1 = arith.constant 0 : i32
    return %c0_i32, %c0_i32_0 : i32, i32
  }
  func.func @transform_3(%arg0: i32, %arg1: memref<2x8xi32, #tpu.memory_space<smem>>) -> (i32, i32) {
    %c0_i32 = arith.constant 0 : i32
    %c0_i32_0 = arith.constant 0 : i32
    %c0_i32_1 = arith.constant 0 : i32
    return %c0_i32, %c0_i32_0 : i32, i32
  }
  func.func @transform_4(%arg0: i32, %arg1: memref<2x8xi32, #tpu.memory_space<smem>>) -> (i32, i32) {
    %c0_i32 = arith.constant 0 : i32
    %c0_i32_0 = arith.constant 0 : i32
    %c0_i32_1 = arith.constant 0 : i32
    return %c0_i32, %c0_i32_0 : i32, i32
  }
  func.func @transform_5(%arg0: i32, %arg1: memref<2x8xi32, #tpu.memory_space<smem>>) -> (i32, i32) {
    %c0_i32 = arith.constant 0 : i32
    %c0_i32_0 = arith.constant 0 : i32
    %c0_i32_1 = arith.constant 0 : i32
    return %c0_i32, %c0_i32_0 : i32, i32
  }
  func.func @transform_6(%arg0: i32, %arg1: memref<2x8xi32, #tpu.memory_space<smem>>) -> (i32, i32, i32) {
    %c0_i32 = arith.constant 0 : i32
    %c0_i32_0 = arith.constant 0 : i32
    %c0_i32_1 = arith.constant 0 : i32
    return %arg0, %c0_i32, %c0_i32_0 : i32, i32, i32
  }
  func.func @transform_7(%arg0: i32, %arg1: memref<2x8xi32, #tpu.memory_space<smem>>) -> (i32, i32, i32) {
    %c0_i32 = arith.constant 0 : i32
    %c0_i32_0 = arith.constant 0 : i32
    %c0_i32_1 = arith.constant 0 : i32
    return %arg0, %c0_i32, %c0_i32_0 : i32, i32, i32
  }
}

</mosaic_0001>

<llo_original>
// kernel: tpu_custom_call.1
$region0: #{tpu_custom_call.1}
  #allocation0 [shape = 'u32[]', space=smem, size = 0x4, offset = 0x4, fixed_abs, tag = 'smem constant byte address 0x4 - core index']
  #allocation1 [shape = 'u32[72,128]{1,0:T(1,128)}', space=vmem, size = 0x9000, scoped, tag = 'internal scratch']
  #allocation2 [shape = 's32[1]{0}', space=sflag, size = 0x4, scoped, tag = 'scoped memory for tpu_custom_call.1']
  #allocation3 [shape = 'u8[1024]{0}', space=smem, size = 0x400, scoped, tag = 'prefetched SMEM operand 0']
  %s0 = inlined_call_operand.vmem [shape: s32[2,8], index: 0, kind: input, shape index: {}]
  %s1 = inlined_call_operand.vmem [shape: f32[20,16], index: 1, kind: input, shape index: {}]
  %s2 = inlined_call_operand.vmem [shape: f32[16,512], index: 2, kind: input, shape index: {}]
  %s3 = inlined_call_operand.hbm [shape: f32[64,256], index: 3, kind: input, shape index: {}]
  %s4 = inlined_call_operand.vmem [shape: f32[1,261], index: 4, kind: input, shape index: {}]
  %s5 = inlined_call_operand.vmem [shape: f32[64,5], index: 5, kind: input, shape index: {}]
  %s6 = inlined_call_operand.vmem [shape: f32[5,5], index: 6, kind: input, shape index: {}]
  %s7 = inlined_call_operand.vmem [shape: f32[2,1,1], index: 7, kind: output, shape index: {0}]
  %s8 = inlined_call_operand.hbm [shape: s32[2,1,8], index: 8, kind: output, shape index: {1}]
  %9 = xla_tuple %s7, %s8
  %s10 = sld [smem:[#allocation0]]
  $region69: #{tpu_custom_call.1} parent=0
    _
  %s12 = ssub.s32 1, %s10
  %s13 = scalar_select 0, %s12, %s10
  %s15 = sshll.u32 %s0, 4
  %s16 = int_to_ptr.vmem [resolvable:$true] %s15
  %18 = dma.vmem_to_smem %s16, 32, [#allocation3], [#allocation2]
  %20 = dma.done [#allocation2], 32
  %21 = sfence
  $region1: #{tpu_custom_call.1} parent=0
    #allocation4 [shape = 'u8[65536]{0}', space=vmem, size = 0x10000, scoped, tag = 'input window, operand 3, single buffered']
    #allocation5 [shape = 's32[2]{0}', space=sflag, size = 0x8, scoped, tag = 'scoped memory for tpu_custom_call.1']
    #allocation6 [shape = 's32[2]{0}', space=sflag, size = 0x8, scoped, tag = 'scoped memory for tpu_custom_call.1']
    #allocation7 [shape = 'u8[1024]{0}', space=vmem, size = 0x400, scoped, tag = 'output window, operand 1']
    %22 = vsyncpa [#allocation5], 0
    %23 = vsyncpa [#allocation6], 0
    %s24 = scalar_lea.sflag [#allocation6], 1
    %25 = vsyncpa %s24, 0
    loop: start=0, step=1, limit=4
    $region2: #{tpu_custom_call.1} parent=1 // loop_pre_header
      _
    $region3: #{tpu_custom_call.1} parent=1 // loop_header
      %s27 = sphi 0, %s31
      %p28 = scmp.ge.s32.totalorder %s27, 4
      %s35 = sphi 0, %s35
      %s37 = sphi 0, %s35
      %s38 = sphi 0, %s37
      %s52 = sphi 0, %s38
      %s56 = sphi 0, %s56
      %s58 = sphi 0, %s56
      %s59 = sphi 0, %s58
      %s73 = sphi 0, %s59
      %s77 = sphi 0, %s77
      %s79 = sphi 0, %s77
      %s80 = sphi 0, %s79
      %s94 = sphi 0, %s80
      %s98 = sphi 0, %s98
      %s100 = sphi 0, %s98
      %s101 = sphi 0, %s100
      %s115 = sphi 0, %s101
      %s119 = sphi 0, %s119
      %s121 = sphi 0, %s119
      %s122 = sphi 0, %s121
      %s136 = sphi 0, %s122
      %s140 = sphi 0, %s140
      %s142 = sphi 0, %s140
      %s143 = sphi 0, %s142
      %s157 = sphi 0, %s143
      %s163 = sphi 0, %s165
      %s166 = sphi 0, %s163
      %s167 = sphi 0, %s166
      %s183 = sphi 0, %s167
      %s189 = sphi 0, %s191
      %s192 = sphi 0, %s189
      %s193 = sphi 0, %s192
      %s209 = sphi 0, %s193
    $region4: #{tpu_custom_call.1} parent=1 // loop_header_branch
      %30 = sbr.rel (%p28) target = $region8
    $region5: #{tpu_custom_call.1} parent=1 // loop_body
      %s32 = ssub.s32 %s27, 1
      %s33 = ssub.s32 %s27, 2
      %s34 = sadd.s32 %s27, 1
      %s36 = sadd.s32 %s35, 1
      %p39 = scmp.eq.s32.totalorder %s27, 1
      %p40 = scmp.ne.s32.totalorder %s35, %s37
      %p41 = scmp.eq.s32.totalorder %s27, 0
      %p42 = por %p40, %p41
      %p43 = scmp.ne.s32.totalorder %s35, %s37
      %p44 = scmp.eq.s32.totalorder %s32, 1
      %p45 = por %p43, %p44
      %p46 = scmp.ne.s32.totalorder %s37, %s38
      %p47 = scmp.eq.s32.totalorder %s32, 0
      %p48 = por %p46, %p47
      %p49 = scmp.ne.s32.totalorder %s37, %s38
      %p50 = scmp.eq.s32.totalorder %s33, 1
      %p51 = por %p49, %p50
      %p53 = scmp.ne.s32.totalorder %s38, %s52
      %p54 = scmp.eq.s32.totalorder %s33, 0
      %p55 = por %p53, %p54
      %s57 = sadd.s32 %s56, 1
      %p60 = scmp.eq.s32.totalorder %s27, 1
      %p61 = scmp.ne.s32.totalorder %s56, %s58
      %p62 = scmp.eq.s32.totalorder %s27, 0
      %p63 = por %p61, %p62
      %p64 = scmp.ne.s32.totalorder %s56, %s58
      %p65 = scmp.eq.s32.totalorder %s32, 1
      %p66 = por %p64, %p65
      %p67 = scmp.ne.s32.totalorder %s58, %s59
      %p68 = scmp.eq.s32.totalorder %s32, 0
      %p69 = por %p67, %p68
      %p70 = scmp.ne.s32.totalorder %s58, %s59
      %p71 = scmp.eq.s32.totalorder %s33, 1
      %p72 = por %p70, %p71
      %p74 = scmp.ne.s32.totalorder %s59, %s73
      %p75 = scmp.eq.s32.totalorder %s33, 0
      %p76 = por %p74, %p75
      %s78 = sadd.s32 %s77, 1
      %p81 = scmp.eq.s32.totalorder %s27, 1
      %p82 = scmp.ne.s32.totalorder %s77, %s79
      %p83 = scmp.eq.s32.totalorder %s27, 0
      %p84 = por %p82, %p83
      %p85 = scmp.ne.s32.totalorder %s77, %s79
      %p86 = scmp.eq.s32.totalorder %s32, 1
      %p87 = por %p85, %p86
      %p88 = scmp.ne.s32.totalorder %s79, %s80
      %p89 = scmp.eq.s32.totalorder %s32, 0
      %p90 = por %p88, %p89
      %p91 = scmp.ne.s32.totalorder %s79, %s80
      %p92 = scmp.eq.s32.totalorder %s33, 1
      %p93 = por %p91, %p92
      %p95 = scmp.ne.s32.totalorder %s80, %s94
      %p96 = scmp.eq.s32.totalorder %s33, 0
      %p97 = por %p95, %p96
      %s99 = sadd.s32 %s98, 1
      %p102 = scmp.eq.s32.totalorder %s27, 1
      %p103 = scmp.ne.s32.totalorder %s98, %s100
      %p104 = scmp.eq.s32.totalorder %s27, 0
      %p105 = por %p103, %p104
      %p106 = scmp.ne.s32.totalorder %s98, %s100
      %p107 = scmp.eq.s32.totalorder %s32, 1
      %p108 = por %p106, %p107
      %p109 = scmp.ne.s32.totalorder %s100, %s101
      %p110 = scmp.eq.s32.totalorder %s32, 0
      %p111 = por %p109, %p110
      %p112 = scmp.ne.s32.totalorder %s100, %s101
      %p113 = scmp.eq.s32.totalorder %s33, 1
      %p114 = por %p112, %p113
      %p116 = scmp.ne.s32.totalorder %s101, %s115
      %p117 = scmp.eq.s32.totalorder %s33, 0
      %p118 = por %p116, %p117
      %s120 = sadd.s32 %s119, 1
      %p123 = scmp.eq.s32.totalorder %s27, 1
      %p124 = scmp.ne.s32.totalorder %s119, %s121
      %p125 = scmp.eq.s32.totalorder %s27, 0
      %p126 = por %p124, %p125
      %p127 = scmp.ne.s32.totalorder %s119, %s121
      %p128 = scmp.eq.s32.totalorder %s32, 1
      %p129 = por %p127, %p128
      %p130 = scmp.ne.s32.totalorder %s121, %s122
      %p131 = scmp.eq.s32.totalorder %s32, 0
      %p132 = por %p130, %p131
      %p133 = scmp.ne.s32.totalorder %s121, %s122
      %p134 = scmp.eq.s32.totalorder %s33, 1
      %p135 = por %p133, %p134
      %p137 = scmp.ne.s32.totalorder %s122, %s136
      %p138 = scmp.eq.s32.totalorder %s33, 0
      %p139 = por %p137, %p138
      %s141 = sadd.s32 %s140, 1
      %p144 = scmp.eq.s32.totalorder %s27, 1
      %p145 = scmp.ne.s32.totalorder %s140, %s142
      %p146 = scmp.eq.s32.totalorder %s27, 0
      %p147 = por %p145, %p146
      %p148 = scmp.ne.s32.totalorder %s140, %s142
      %p149 = scmp.eq.s32.totalorder %s32, 1
      %p150 = por %p148, %p149
      %p151 = scmp.ne.s32.totalorder %s142, %s143
      %p152 = scmp.eq.s32.totalorder %s32, 0
      %p153 = por %p151, %p152
      %p154 = scmp.ne.s32.totalorder %s142, %s143
      %p155 = scmp.eq.s32.totalorder %s33, 1
      %p156 = por %p154, %p155
      %p158 = scmp.ne.s32.totalorder %s143, %s157
      %p159 = scmp.eq.s32.totalorder %s33, 0
      %p160 = por %p158, %p159
      %s161 = ssub.s32 %s27, %s34
      %p162 = scmp.eq.s32.totalorder %s161, 0
      %s164 = sadd.s32 %s163, 1
      %s165 = scalar_select %p162, %s163, %s164
      %p168 = pneg %p162
      %p169 = scmp.eq.s32.totalorder %s27, 1
      %p170 = por %p168, %p169
      %p171 = scmp.ne.s32.totalorder %s163, %s166
      %p172 = scmp.eq.s32.totalorder %s27, 0
      %p173 = por %p171, %p172
      %p174 = scmp.ne.s32.totalorder %s163, %s166
      %p175 = scmp.eq.s32.totalorder %s32, 1
      %p176 = por %p174, %p175
      %p177 = scmp.ne.s32.totalorder %s166, %s167
      %p178 = scmp.eq.s32.totalorder %s32, 0
      %p179 = por %p177, %p178
      %p180 = scmp.ne.s32.totalorder %s166, %s167
      %p181 = scmp.eq.s32.totalorder %s33, 1
      %p182 = por %p180, %p181
      %p184 = scmp.ne.s32.totalorder %s167, %s183
      %p185 = scmp.eq.s32.totalorder %s33, 0
      %p186 = por %p184, %p185
      %s187 = ssub.s32 %s27, %s34
      %p188 = scmp.eq.s32.totalorder %s187, 0
      %s190 = sadd.s32 %s189, 1
      %s191 = scalar_select %p188, %s189, %s190
      %p194 = pneg %p188
      %p195 = scmp.eq.s32.totalorder %s27, 1
      %p196 = por %p194, %p195
      %p197 = scmp.ne.s32.totalorder %s189, %s192
      %p198 = scmp.eq.s32.totalorder %s27, 0
      %p199 = por %p197, %p198
      %p200 = scmp.ne.s32.totalorder %s189, %s192
      %p201 = scmp.eq.s32.totalorder %s32, 1
      %p202 = por %p200, %p201
      %p203 = scmp.ne.s32.totalorder %s192, %s193
      %p204 = scmp.eq.s32.totalorder %s32, 0
      %p205 = por %p203, %p204
      %p206 = scmp.ne.s32.totalorder %s192, %s193
      %p207 = scmp.eq.s32.totalorder %s33, 1
      %p208 = por %p206, %p207
      %p210 = scmp.ne.s32.totalorder %s193, %s209
      %p211 = scmp.eq.s32.totalorder %s33, 0
      %p212 = por %p210, %p211
      %p213 = scmp.le.s32.totalorder 1, %s27
      %p214 = scmp.lt.s32.totalorder %s27, 3
      %p215 = pnand %p213, %p214
      %p216 = pneg %p215
      // Predicated region
      $region9: #{tpu_custom_call.1} parent=5 // pred_check
        _
      $region10: #{tpu_custom_call.1} parent=5 // pred_check_branch
        %218 = sbr.rel (%p215) target = $region12
      $region11: #{tpu_custom_call.1} parent=5 // pred_region
        %s219 = ssub.s32 %s27, 1
        // Predicated region
        $region13: #{tpu_custom_call.1} parent=11 // pred_check
          %p220 = pneg %p48
        $region14: #{tpu_custom_call.1} parent=11 // pred_check_branch
          %222 = sbr.rel (%p220) target = $region16
        $region15: #{tpu_custom_call.1} parent=11 // pred_region
          _
        $region16: #{tpu_custom_call.1} parent=11 // pred_fallthru
          _
        // Predicated region
        $region17: #{tpu_custom_call.1} parent=11 // pred_check
          %p223 = pneg %p69
        $region18: #{tpu_custom_call.1} parent=11 // pred_check_branch
          %225 = sbr.rel (%p223) target = $region20
        $region19: #{tpu_custom_call.1} parent=11 // pred_region
          _
        $region20: #{tpu_custom_call.1} parent=11 // pred_fallthru
          _
        // Predicated region
        $region21: #{tpu_custom_call.1} parent=11 // pred_check
          %p226 = pneg %p90
        $region22: #{tpu_custom_call.1} parent=11 // pred_check_branch
          %228 = sbr.rel (%p226) target = $region24
        $region23: #{tpu_custom_call.1} parent=11 // pred_region
          %230 = vsyncadd [#allocation5], 0
          %s231 = sshll.u32 %s3, 4
          %s232 = int_to_ptr.hbm [resolvable:$true] %s231
          %s233 = sshll.u32 [#allocation4], 4
          %s234 = int_to_ptr.vmem [resolvable:$true] %s233
          %239 = dma.hbm_to_vmem [thread:$0]  %s232, 2048, %s234, [#allocation5], 256, 256, 16
        $region24: #{tpu_custom_call.1} parent=11 // pred_fallthru
          _
        // Predicated region
        $region25: #{tpu_custom_call.1} parent=11 // pred_check
          %p240 = pneg %p111
        $region26: #{tpu_custom_call.1} parent=11 // pred_check_branch
          %242 = sbr.rel (%p240) target = $region28
        $region27: #{tpu_custom_call.1} parent=11 // pred_region
          _
        $region28: #{tpu_custom_call.1} parent=11 // pred_fallthru
          _
        // Predicated region
        $region29: #{tpu_custom_call.1} parent=11 // pred_check
          %p243 = pneg %p132
        $region30: #{tpu_custom_call.1} parent=11 // pred_check_branch
          %245 = sbr.rel (%p243) target = $region32
        $region31: #{tpu_custom_call.1} parent=11 // pred_region
          _
        $region32: #{tpu_custom_call.1} parent=11 // pred_fallthru
          _
        // Predicated region
        $region33: #{tpu_custom_call.1} parent=11 // pred_check
          %p246 = pneg %p153
        $region34: #{tpu_custom_call.1} parent=11 // pred_check_branch
          %248 = sbr.rel (%p246) target = $region36
        $region35: #{tpu_custom_call.1} parent=11 // pred_region
          _
        $region36: #{tpu_custom_call.1} parent=11 // pred_fallthru
          _
      $region12: #{tpu_custom_call.1} parent=5 // pred_fallthru
        _
      %p249 = scmp.lt.s32.totalorder %s27, 2
      // Predicated region
      $region37: #{tpu_custom_call.1} parent=5 // pred_check
        %p250 = pneg %p249
      $region38: #{tpu_custom_call.1} parent=5 // pred_check_branch
        %252 = sbr.rel (%p250) target = $region40
      $region39: #{tpu_custom_call.1} parent=5 // pred_region
        _
      $region40: #{tpu_custom_call.1} parent=5 // pred_fallthru
        _
      %p253 = scmp.le.s32.totalorder 1, %s27
      %p254 = scmp.lt.s32.totalorder %s27, 3
      %p255 = pnand %p253, %p254
      %p256 = pneg %p255
      // Predicated region
      $region41: #{tpu_custom_call.1} parent=5 // pred_check
        _
      $region42: #{tpu_custom_call.1} parent=5 // pred_check_branch
        %258 = sbr.rel (%p255) target = $region44
      $region43: #{tpu_custom_call.1} parent=5 // pred_region
        %s259 = ssub.s32 %s27, 1
        // Predicated region
        $region45: #{tpu_custom_call.1} parent=43 // pred_check
          %p260 = pneg %p90
        $region46: #{tpu_custom_call.1} parent=43 // pred_check_branch
          %262 = sbr.rel (%p260) target = $region48
        $region47: #{tpu_custom_call.1} parent=43 // pred_region
          %264 = dma.done [#allocation5], 2048
        $region48: #{tpu_custom_call.1} parent=43 // pred_fallthru
          _
        %p265 = pneg %p48
        %p266 = pneg %p45
        %p267 = pneg %p69
        %p268 = pneg %p66
        %p269 = pneg %p90
        %p270 = pneg %p87
        %p271 = pneg %p111
        %p272 = pneg %p108
        %p273 = pneg %p132
        %p274 = pneg %p129
        %p275 = pneg %p153
        %p276 = pneg %p150
        %p277 = pneg %p179
        %p278 = pneg %p176
        %p279 = scmp.lt.s32.totalorder %s32, 1
        %s280 = scalar_select %p279, %s32, 1
        %s281 = scalar_lea.vmem %s7, %s280
        %p282 = pneg %p205
        %p283 = pneg %p202
        %s284 = sand.u32 %s192, 1
        %s285 = scalar_lea.sflag [#allocation6], %s284
        %s286 = sand.u32 %s192, 1
        %s287 = scalar_lea.vmem [#allocation7], %s286
        %p288 = scmp.lt.s32.totalorder %s32, 1
        %s289 = scalar_select %p288, %s32, 1
        %s290 = scalar_lea.vmem %s7, %s289
        %s291 = smul.u32 %s32, 128
        %s292 = sld [smem:[#allocation3 + %s291]]
        %s293 = scalar_lea.vmem %s1, %s292
        %v294 = vld [vmem:[%s293] sm:$0x1]
        %s295 = sadd.s32 %s291, 1
        %s296 = sld [smem:[#allocation3 + %s295]]
        %s297 = scalar_lea.vmem %s1, %s296
        %v298 = vld [vmem:[%s297] sm:$0x1]
        %s299 = sadd.s32 %s291, 2
        %s300 = sld [smem:[#allocation3 + %s299]]
        %s301 = scalar_lea.vmem %s1, %s300
        %v302 = vld [vmem:[%s301] sm:$0x1]
        %s303 = sadd.s32 %s291, 3
        %s304 = sld [smem:[#allocation3 + %s303]]
        %s305 = scalar_lea.vmem %s1, %s304
        %v306 = vld [vmem:[%s305] sm:$0x1]
        %s307 = sadd.s32 %s291, 4
        %s308 = sld [smem:[#allocation3 + %s307]]
        %s309 = scalar_lea.vmem %s1, %s308
        %v310 = vld [vmem:[%s309] sm:$0x1]
        %s311 = sadd.s32 %s291, 5
        %s312 = sld [smem:[#allocation3 + %s311]]
        %s313 = scalar_lea.vmem %s1, %s312
        %v314 = vld [vmem:[%s313] sm:$0x1]
        %s315 = sadd.s32 %s291, 6
        %s316 = sld [smem:[#allocation3 + %s315]]
        %s317 = scalar_lea.vmem %s1, %s316
        %v318 = vld [vmem:[%s317] sm:$0x1]
        %s319 = sadd.s32 %s291, 7
        %s320 = sld [smem:[#allocation3 + %s319]]
        %s321 = scalar_lea.vmem %s1, %s320
        %v322 = vld [vmem:[%s321] sm:$0x1]
        %v324 = vrot.slane %v298, 7
        %v327 = vrot.slane %v302, 6
        %v330 = vrot.slane %v306, 5
        %v333 = vrot.slane %v310, 4
        %v336 = vrot.slane %v314, 3
        %v339 = vrot.slane %v318, 2
        %v342 = vrot.slane %v322, 1
        %vm344 = vcmask 1040384
        %v345 = vsel %vm344, %v294, %v324
        %vm346 = vcmask 1041408
        %v347 = vsel %vm346, %v345, %v327
        %vm348 = vcmask 1042432
        %v349 = vsel %vm348, %v347, %v330
        %vm350 = vcmask 1043456
        %v351 = vsel %vm350, %v349, %v333
        %vm352 = vcmask 1044480
        %v353 = vsel %vm352, %v351, %v336
        %vm354 = vcmask 1045504
        %v355 = vsel %vm354, %v353, %v339
        %vm356 = vcmask 1046528
        %v357 = vsel %vm356, %v355, %v342
        %v358 = vld [vmem:[%s2] sm:$0xff]
        %v359 = vld [vmem:[%s2 + $0x8] sm:$0xff]
        %v360 = vld [vmem:[%s2 + $0x20] sm:$0xff]
        %v361 = vld [vmem:[%s2 + $0x28] sm:$0xff]
        %vm362 = vcmask 130048
        %v364 = vsel %vm362, %v357, 0
        %366 = vmatpush.msra.mxu0 0.0
        %367 = vmatpush.msra.mxu0 0.0
        %368 = vmatpush.msra.mxu0 0.0
        %369 = vmatpush.msra.mxu0 0.0
        %370 = vmatpush.msra.mxu0 0.0
        %371 = vmatpush.msra.mxu0 0.0
        %372 = vmatpush.msra.mxu0 0.0
        %373 = vmatpush.msra.mxu0 0.0
        %374 = vmatpush.msra.mxu0 0.0
        %375 = vmatpush.msra.mxu0 0.0
        %376 = vmatpush.msra.mxu0 0.0
        %377 = vmatpush.msra.mxu0 0.0
        %378 = vmatpush.msra.mxu0 0.0
        %379 = vmatpush.msra.mxu0 0.0
        %380 = vmatpush.msra.mxu0 %v360
        %381 = vmatpush.msra.mxu0 %v358
        %382 = vmatmul.f32.gmra.mxu0 %v364
        %v383 = vpop.f32.mrf.mxu0
        %v384 = vadd.f32 0.0, %v383
        %385 = vdwg.mxu0
        %386 = vmatpush.msra.mxu0 0.0
        %387 = vmatpush.msra.mxu0 0.0
        %388 = vmatpush.msra.mxu0 0.0
        %389 = vmatpush.msra.mxu0 0.0
        %390 = vmatpush.msra.mxu0 0.0
        %391 = vmatpush.msra.mxu0 0.0
        %392 = vmatpush.msra.mxu0 0.0
        %393 = vmatpush.msra.mxu0 0.0
        %394 = vmatpush.msra.mxu0 0.0
        %395 = vmatpush.msra.mxu0 0.0
        %396 = vmatpush.msra.mxu0 0.0
        %397 = vmatpush.msra.mxu0 0.0
        %398 = vmatpush.msra.mxu0 0.0
        %399 = vmatpush.msra.mxu0 0.0
        %400 = vmatpush.msra.mxu0 %v361
        %401 = vmatpush.msra.mxu0 %v359
        %402 = vmatmul.f32.gmra.mxu0 %v364
        %v403 = vpop.f32.mrf.mxu0
        %v404 = vadd.f32 0.0, %v403
        %405 = vdwg.mxu0
        %v406 = vld [vmem:[%s2 + $0x10] sm:$0xff]
        %v407 = vld [vmem:[%s2 + $0x18] sm:$0xff]
        %v408 = vld [vmem:[%s2 + $0x30] sm:$0xff]
        %v409 = vld [vmem:[%s2 + $0x38] sm:$0xff]
        %410 = vmatpush.msra.mxu0 0.0
        %411 = vmatpush.msra.mxu0 0.0
        %412 = vmatpush.msra.mxu0 0.0
        %413 = vmatpush.msra.mxu0 0.0
        %414 = vmatpush.msra.mxu0 0.0
        %415 = vmatpush.msra.mxu0 0.0
        %416 = vmatpush.msra.mxu0 0.0
        %417 = vmatpush.msra.mxu0 0.0
        %418 = vmatpush.msra.mxu0 0.0
        %419 = vmatpush.msra.mxu0 0.0
        %420 = vmatpush.msra.mxu0 0.0
        %421 = vmatpush.msra.mxu0 0.0
        %422 = vmatpush.msra.mxu0 0.0
        %423 = vmatpush.msra.mxu0 0.0
        %424 = vmatpush.msra.mxu0 %v408
        %425 = vmatpush.msra.mxu0 %v406
        %426 = vmatmul.f32.gmra.mxu0 %v364
        %v427 = vpop.f32.mrf.mxu0
        %v428 = vadd.f32 0.0, %v427
        %429 = vdwg.mxu0
        %430 = vmatpush.msra.mxu0 0.0
        %431 = vmatpush.msra.mxu0 0.0
        %432 = vmatpush.msra.mxu0 0.0
        %433 = vmatpush.msra.mxu0 0.0
        %434 = vmatpush.msra.mxu0 0.0
        %435 = vmatpush.msra.mxu0 0.0
        %436 = vmatpush.msra.mxu0 0.0
        %437 = vmatpush.msra.mxu0 0.0
        %438 = vmatpush.msra.mxu0 0.0
        %439 = vmatpush.msra.mxu0 0.0
        %440 = vmatpush.msra.mxu0 0.0
        %441 = vmatpush.msra.mxu0 0.0
        %442 = vmatpush.msra.mxu0 0.0
        %443 = vmatpush.msra.mxu0 0.0
        %444 = vmatpush.msra.mxu0 %v409
        %445 = vmatpush.msra.mxu0 %v407
        %446 = vmatmul.f32.gmra.mxu0 %v364
        %v447 = vpop.f32.mrf.mxu0
        %v448 = vadd.f32 0.0, %v447
        %449 = vdwg.mxu0
        %v450 = vld [vmem:[%s4] sm:$0x3]
        %v451 = vld [vmem:[%s4 + $0x2] sm:$0x1]
        %v454 = vrot.slane %v428, 7
        %v455 = vrot.slane %v448, 7
        %v458 = vadd.f32 %v384, %v454
        %v459 = vadd.f32 %v404, %v455
        %v460 = vld [vmem:[#allocation4] sm:$0xff]
        %v461 = vld [vmem:[#allocation4 + $0x8] sm:$0xff]
        %v462 = vld [vmem:[#allocation4 + $0x10] sm:$0xff]
        %v463 = vld [vmem:[#allocation4 + $0x18] sm:$0xff]
        %v464 = vld [vmem:[#allocation4 + $0x20] sm:$0xff]
        %v465 = vld [vmem:[#allocation4 + $0x28] sm:$0xff]
        %v466 = vld [vmem:[#allocation4 + $0x30] sm:$0xff]
        %v467 = vld [vmem:[#allocation4 + $0x38] sm:$0xff]
        %v468 = vld [vmem:[#allocation4 + $0x40] sm:$0xff]
        %v469 = vld [vmem:[#allocation4 + $0x48] sm:$0xff]
        %v470 = vld [vmem:[#allocation4 + $0x50] sm:$0xff]
        %v471 = vld [vmem:[#allocation4 + $0x58] sm:$0xff]
        %v472 = vld [vmem:[#allocation4 + $0x60] sm:$0xff]
        %v473 = vld [vmem:[#allocation4 + $0x68] sm:$0xff]
        %v474 = vld [vmem:[#allocation4 + $0x70] sm:$0xff]
        %v475 = vld [vmem:[#allocation4 + $0x78] sm:$0xff]
        %vm476 = vcmask 523264
        %v478 = vsel %vm476, 0.0, 0
        %480 = vmatpush.msra.mxu0 0.0
        %481 = vmatpush.msra.mxu0 0.0
        %482 = vmatpush.msra.mxu0 0.0
        %483 = vmatpush.msra.mxu0 0.0
        %484 = vmatpush.msra.mxu0 0.0
        %485 = vmatpush.msra.mxu0 0.0
        %486 = vmatpush.msra.mxu0 0.0
        %487 = vmatpush.msra.mxu0 0.0
        %488 = vmatpush.msra.mxu0 %v474
        %489 = vmatpush.msra.mxu0 %v472
        %490 = vmatpush.msra.mxu0 %v470
        %491 = vmatpush.msra.mxu0 %v468
        %492 = vmatpush.msra.mxu0 %v466
        %493 = vmatpush.msra.mxu0 %v464
        %494 = vmatpush.msra.mxu0 %v462
        %495 = vmatpush.msra.mxu0 %v460
        %496 = vmatmul.f32.gmra.mxu0 %v478
        %v497 = vpop.f32.mrf.mxu0
        %v498 = vadd.f32 0.0, %v497
        %499 = vdwg.mxu0
        %500 = vmatpush.msra.mxu0 0.0
        %501 = vmatpush.msra.mxu0 0.0
        %502 = vmatpush.msra.mxu0 0.0
        %503 = vmatpush.msra.mxu0 0.0
        %504 = vmatpush.msra.mxu0 0.0
        %505 = vmatpush.msra.mxu0 0.0
        %506 = vmatpush.msra.mxu0 0.0
        %507 = vmatpush.msra.mxu0 0.0
        %508 = vmatpush.msra.mxu0 %v475
        %509 = vmatpush.msra.mxu0 %v473
        %510 = vmatpush.msra.mxu0 %v471
        %511 = vmatpush.msra.mxu0 %v469
        %512 = vmatpush.msra.mxu0 %v467
        %513 = vmatpush.msra.mxu0 %v465
        %514 = vmatpush.msra.mxu0 %v463
        %515 = vmatpush.msra.mxu0 %v461
        %516 = vmatmul.f32.gmra.mxu0 %v478
        %v517 = vpop.f32.mrf.mxu0
        %v518 = vadd.f32 0.0, %v517
        %519 = vdwg.mxu0
        %v520 = vadd.f32 %v458, %v498
        %v521 = vadd.f32 %v459, %v518
        %v523 = vperm.slane %v450, 0
        %v524 = vperm.slane %v450, 1
        %v527 = vadd.f32 %v520, %v523
        %v528 = vadd.f32 %v521, %v524
        %v529 = vxor.u32 %v527, 2147483648
        %v530 = vxor.u32 %v528, 2147483648
        %v531 = vmul.f32 %v529, 1.442695
        %v532 = vpow.pop %v531
        %v533 = vmul.f32 %v530, 1.442695
        %v534 = vpow.pop %v533
        %v535 = vadd.f32 %v532, 1.0
        %v536 = vadd.f32 %v534, 1.0
        %v537 = vrcp.pop %v535
        %v538 = vmul.f32 %v535, %v537
        %v539 = vsub.f32 1.0, %v538
        %v540 = vmul.f32 %v537, %v539
        %v541 = vadd.f32 %v537, %v540
        %vm542 = vweird.f32 %v535
        %vm543 = vweird.f32 %v537
        %vm544 = vmor %vm542, %vm543
        %v545 = vsel %vm544, %v537, %v541
        %v546 = vand.u32 2147483647, %v535
        %vm547 = vcmp.eq.f32.partialorder %v546, 8.507059e+37
        %v548 = vand.u32 %v535, 2147483648
        %v549 = vor.u32 1.1754944e-38, %v548
        %v550 = vsel %vm547, %v549, %v545
        %v551 = vmul.f32 1.0, %v550
        %v552 = vrcp.pop %v536
        %v553 = vmul.f32 %v536, %v552
        %v554 = vsub.f32 1.0, %v553
        %v555 = vmul.f32 %v552, %v554
        %v556 = vadd.f32 %v552, %v555
        %vm557 = vweird.f32 %v536
        %vm558 = vweird.f32 %v552
        %vm559 = vmor %vm557, %vm558
        %v560 = vsel %vm559, %v552, %v556
        %v561 = vand.u32 2147483647, %v536
        %vm562 = vcmp.eq.f32.partialorder %v561, 8.507059e+37
        %v563 = vand.u32 %v536, 2147483648
        %v564 = vor.u32 1.1754944e-38, %v563
        %v565 = vsel %vm562, %v564, %v560
        %v566 = vmul.f32 1.0, %v565
        %v567 = vtanh.pop %v528
        %v568 = vmul.f32 %v551, 0.0
        %570 = vrot.lane.b32.xlu0 %v567, 64
        %v571 = vpop.permute.xlu0 %570
        %v573 = vmul.f32 %v551, %v571
        %575 = vrot.lane.b32.xlu0 %v573, 64
        %v576 = vpop.permute.xlu0 %575
        %v578 = vadd.f32 %v568, %v576
        %v579 = vtanh.pop %v578
        %581 = vrot.lane.b32.xlu0 %v579, 64
        %v582 = vpop.permute.xlu0 %581
        %v584 = vmul.f32 %v566, %v582
        %v585 = vrot.slane %v428, 5
        %v586 = vrot.slane %v448, 5
        %v589 = vadd.f32 %v384, %v585
        %v590 = vadd.f32 %v404, %v586
        %v592 = vsel %vm476, %v584, 0
        %594 = vmatpush.msra.mxu0 0.0
        %595 = vmatpush.msra.mxu0 0.0
        %596 = vmatpush.msra.mxu0 0.0
        %597 = vmatpush.msra.mxu0 0.0
        %598 = vmatpush.msra.mxu0 0.0
        %599 = vmatpush.msra.mxu0 0.0
        %600 = vmatpush.msra.mxu0 0.0
        %601 = vmatpush.msra.mxu0 0.0
        %602 = vmatpush.msra.mxu0 %v474
        %603 = vmatpush.msra.mxu0 %v472
        %604 = vmatpush.msra.mxu0 %v470
        %605 = vmatpush.msra.mxu0 %v468
        %606 = vmatpush.msra.mxu0 %v466
        %607 = vmatpush.msra.mxu0 %v464
        %608 = vmatpush.msra.mxu0 %v462
        %609 = vmatpush.msra.mxu0 %v460
        %610 = vmatmul.f32.gmra.mxu0 %v592
        %v611 = vpop.f32.mrf.mxu0
        %v612 = vadd.f32 0.0, %v611
        %613 = vdwg.mxu0
        %614 = vmatpush.msra.mxu0 0.0
        %615 = vmatpush.msra.mxu0 0.0
        %616 = vmatpush.msra.mxu0 0.0
        %617 = vmatpush.msra.mxu0 0.0
        %618 = vmatpush.msra.mxu0 0.0
        %619 = vmatpush.msra.mxu0 0.0
        %620 = vmatpush.msra.mxu0 0.0
        %621 = vmatpush.msra.mxu0 0.0
        %622 = vmatpush.msra.mxu0 %v475
        %623 = vmatpush.msra.mxu0 %v473
        %624 = vmatpush.msra.mxu0 %v471
        %625 = vmatpush.msra.mxu0 %v469
        %626 = vmatpush.msra.mxu0 %v467
        %627 = vmatpush.msra.mxu0 %v465
        %628 = vmatpush.msra.mxu0 %v463
        %629 = vmatpush.msra.mxu0 %v461
        %630 = vmatmul.f32.gmra.mxu0 %v592
        %v631 = vpop.f32.mrf.mxu0
        %v632 = vadd.f32 0.0, %v631
        %633 = vdwg.mxu0
        %v636 = vrot.slane %v612, 7
        %v637 = vrot.slane %v632, 7
        %v640 = vadd.f32 %v589, %v636
        %v641 = vadd.f32 %v590, %v637
        %v642 = vadd.f32 %v640, %v523
        %v643 = vadd.f32 %v641, %v524
        %v644 = vxor.u32 %v642, 2147483648
        %v645 = vxor.u32 %v643, 2147483648
        %v646 = vmul.f32 %v644, 1.442695
        %v647 = vpow.pop %v646
        %v648 = vmul.f32 %v645, 1.442695
        %v649 = vpow.pop %v648
        %v650 = vadd.f32 %v647, 1.0
        %v651 = vadd.f32 %v649, 1.0
        %v652 = vrcp.pop %v650
        %v653 = vmul.f32 %v650, %v652
        %v654 = vsub.f32 1.0, %v653
        %v655 = vmul.f32 %v652, %v654
        %v656 = vadd.f32 %v652, %v655
        %vm657 = vweird.f32 %v650
        %vm658 = vweird.f32 %v652
        %vm659 = vmor %vm657, %vm658
        %v660 = vsel %vm659, %v652, %v656
        %v661 = vand.u32 2147483647, %v650
        %vm662 = vcmp.eq.f32.partialorder %v661, 8.507059e+37
        %v663 = vand.u32 %v650, 2147483648
        %v664 = vor.u32 1.1754944e-38, %v663
        %v665 = vsel %vm662, %v664, %v660
        %v666 = vmul.f32 1.0, %v665
        %v667 = vrcp.pop %v651
        %v668 = vmul.f32 %v651, %v667
        %v669 = vsub.f32 1.0, %v668
        %v670 = vmul.f32 %v667, %v669
        %v671 = vadd.f32 %v667, %v670
        %vm672 = vweird.f32 %v651
        %vm673 = vweird.f32 %v667
        %vm674 = vmor %vm672, %vm673
        %v675 = vsel %vm674, %v667, %v671
        %v676 = vand.u32 2147483647, %v651
        %vm677 = vcmp.eq.f32.partialorder %v676, 8.507059e+37
        %v678 = vand.u32 %v651, 2147483648
        %v679 = vor.u32 1.1754944e-38, %v678
        %v680 = vsel %vm677, %v679, %v675
        %v681 = vmul.f32 1.0, %v680
        %v682 = vtanh.pop %v643
        %v684 = vrot.slane %v578, 7
        %v686 = vmul.f32 %v666, %v684
        %688 = vrot.lane.b32.xlu0 %v682, 64
        %v689 = vpop.permute.xlu0 %688
        %v691 = vmul.f32 %v666, %v689
        %693 = vrot.lane.b32.xlu0 %v691, 64
        %v694 = vpop.permute.xlu0 %693
        %v696 = vadd.f32 %v686, %v694
        %v697 = vtanh.pop %v696
        %699 = vrot.lane.b32.xlu0 %v697, 64
        %v700 = vpop.permute.xlu0 %699
        %v702 = vmul.f32 %v681, %v700
        %v703 = vrot.slane %v428, 3
        %v704 = vrot.slane %v448, 3
        %v707 = vadd.f32 %v384, %v703
        %v708 = vadd.f32 %v404, %v704
        %v710 = vrot.slane %v702, 1
        %v711 = vsel %vm476, %v710, 0
        %713 = vmatpush.msra.mxu0 0.0
        %714 = vmatpush.msra.mxu0 0.0
        %715 = vmatpush.msra.mxu0 0.0
        %716 = vmatpush.msra.mxu0 0.0
        %717 = vmatpush.msra.mxu0 0.0
        %718 = vmatpush.msra.mxu0 0.0
        %719 = vmatpush.msra.mxu0 0.0
        %720 = vmatpush.msra.mxu0 0.0
        %721 = vmatpush.msra.mxu0 %v474
        %722 = vmatpush.msra.mxu0 %v472
        %723 = vmatpush.msra.mxu0 %v470
        %724 = vmatpush.msra.mxu0 %v468
        %725 = vmatpush.msra.mxu0 %v466
        %726 = vmatpush.msra.mxu0 %v464
        %727 = vmatpush.msra.mxu0 %v462
        %728 = vmatpush.msra.mxu0 %v460
        %729 = vmatmul.f32.gmra.mxu0 %v711
        %v730 = vpop.f32.mrf.mxu0
        %v731 = vadd.f32 0.0, %v730
        %732 = vdwg.mxu0
        %733 = vmatpush.msra.mxu0 0.0
        %734 = vmatpush.msra.mxu0 0.0
        %735 = vmatpush.msra.mxu0 0.0
        %736 = vmatpush.msra.mxu0 0.0
        %737 = vmatpush.msra.mxu0 0.0
        %738 = vmatpush.msra.mxu0 0.0
        %739 = vmatpush.msra.mxu0 0.0
        %740 = vmatpush.msra.mxu0 0.0
        %741 = vmatpush.msra.mxu0 %v475
        %742 = vmatpush.msra.mxu0 %v473
        %743 = vmatpush.msra.mxu0 %v471
        %744 = vmatpush.msra.mxu0 %v469
        %745 = vmatpush.msra.mxu0 %v467
        %746 = vmatpush.msra.mxu0 %v465
        %747 = vmatpush.msra.mxu0 %v463
        %748 = vmatpush.msra.mxu0 %v461
        %749 = vmatmul.f32.gmra.mxu0 %v711
        %v750 = vpop.f32.mrf.mxu0
        %v751 = vadd.f32 0.0, %v750
        %752 = vdwg.mxu0
        %v755 = vrot.slane %v731, 6
        %v756 = vrot.slane %v751, 6
        %v759 = vadd.f32 %v707, %v755
        %v760 = vadd.f32 %v708, %v756
        %v761 = vadd.f32 %v759, %v523
        %v762 = vadd.f32 %v760, %v524
        %v763 = vxor.u32 %v761, 2147483648
        %v764 = vxor.u32 %v762, 2147483648
        %v765 = vmul.f32 %v763, 1.442695
        %v766 = vpow.pop %v765
        %v767 = vmul.f32 %v764, 1.442695
        %v768 = vpow.pop %v767
        %v769 = vadd.f32 %v766, 1.0
        %v770 = vadd.f32 %v768, 1.0
        %v771 = vrcp.pop %v769
        %v772 = vmul.f32 %v769, %v771
        %v773 = vsub.f32 1.0, %v772
        %v774 = vmul.f32 %v771, %v773
        %v775 = vadd.f32 %v771, %v774
        %vm776 = vweird.f32 %v769
        %vm777 = vweird.f32 %v771
        %vm778 = vmor %vm776, %vm777
        %v779 = vsel %vm778, %v771, %v775
        %v780 = vand.u32 2147483647, %v769
        %vm781 = vcmp.eq.f32.partialorder %v780, 8.507059e+37
        %v782 = vand.u32 %v769, 2147483648
        %v783 = vor.u32 1.1754944e-38, %v782
        %v784 = vsel %vm781, %v783, %v779
        %v785 = vmul.f32 1.0, %v784
        %v786 = vrcp.pop %v770
        %v787 = vmul.f32 %v770, %v786
        %v788 = vsub.f32 1.0, %v787
        %v789 = vmul.f32 %v786, %v788
        %v790 = vadd.f32 %v786, %v789
        %vm791 = vweird.f32 %v770
        %vm792 = vweird.f32 %v786
        %vm793 = vmor %vm791, %vm792
        %v794 = vsel %vm793, %v786, %v790
        %v795 = vand.u32 2147483647, %v770
        %vm796 = vcmp.eq.f32.partialorder %v795, 8.507059e+37
        %v797 = vand.u32 %v770, 2147483648
        %v798 = vor.u32 1.1754944e-38, %v797
        %v799 = vsel %vm796, %v798, %v794
        %v800 = vmul.f32 1.0, %v799
        %v801 = vtanh.pop %v762
        %v803 = vrot.slane %v696, 7
        %v805 = vmul.f32 %v785, %v803
        %807 = vrot.lane.b32.xlu0 %v801, 64
        %v808 = vpop.permute.xlu0 %807
        %v810 = vmul.f32 %v785, %v808
        %812 = vrot.lane.b32.xlu0 %v810, 64
        %v813 = vpop.permute.xlu0 %812
        %v815 = vadd.f32 %v805, %v813
        %v816 = vtanh.pop %v815
        %818 = vrot.lane.b32.xlu0 %v816, 64
        %v819 = vpop.permute.xlu0 %818
        %v821 = vmul.f32 %v800, %v819
        %v822 = vrot.slane %v428, 1
        %v823 = vrot.slane %v448, 1
        %v826 = vadd.f32 %v384, %v822
        %v827 = vadd.f32 %v404, %v823
        %v829 = vrot.slane %v821, 2
        %v830 = vsel %vm476, %v829, 0
        %832 = vmatpush.msra.mxu0 0.0
        %833 = vmatpush.msra.mxu0 0.0
        %834 = vmatpush.msra.mxu0 0.0
        %835 = vmatpush.msra.mxu0 0.0
        %836 = vmatpush.msra.mxu0 0.0
        %837 = vmatpush.msra.mxu0 0.0
        %838 = vmatpush.msra.mxu0 0.0
        %839 = vmatpush.msra.mxu0 0.0
        %840 = vmatpush.msra.mxu0 %v474
        %841 = vmatpush.msra.mxu0 %v472
        %842 = vmatpush.msra.mxu0 %v470
        %843 = vmatpush.msra.mxu0 %v468
        %844 = vmatpush.msra.mxu0 %v466
        %845 = vmatpush.msra.mxu0 %v464
        %846 = vmatpush.msra.mxu0 %v462
        %847 = vmatpush.msra.mxu0 %v460
        %848 = vmatmul.f32.gmra.mxu0 %v830
        %v849 = vpop.f32.mrf.mxu0
        %v850 = vadd.f32 0.0, %v849
        %851 = vdwg.mxu0
        %852 = vmatpush.msra.mxu0 0.0
        %853 = vmatpush.msra.mxu0 0.0
        %854 = vmatpush.msra.mxu0 0.0
        %855 = vmatpush.msra.mxu0 0.0
        %856 = vmatpush.msra.mxu0 0.0
        %857 = vmatpush.msra.mxu0 0.0
        %858 = vmatpush.msra.mxu0 0.0
        %859 = vmatpush.msra.mxu0 0.0
        %860 = vmatpush.msra.mxu0 %v475
        %861 = vmatpush.msra.mxu0 %v473
        %862 = vmatpush.msra.mxu0 %v471
        %863 = vmatpush.msra.mxu0 %v469
        %864 = vmatpush.msra.mxu0 %v467
        %865 = vmatpush.msra.mxu0 %v465
        %866 = vmatpush.msra.mxu0 %v463
        %867 = vmatpush.msra.mxu0 %v461
        %868 = vmatmul.f32.gmra.mxu0 %v830
        %v869 = vpop.f32.mrf.mxu0
        %v870 = vadd.f32 0.0, %v869
        %871 = vdwg.mxu0
        %v874 = vrot.slane %v850, 5
        %v875 = vrot.slane %v870, 5
        %v878 = vadd.f32 %v826, %v874
        %v879 = vadd.f32 %v827, %v875
        %v880 = vadd.f32 %v878, %v523
        %v881 = vadd.f32 %v879, %v524
        %v882 = vxor.u32 %v880, 2147483648
        %v883 = vxor.u32 %v881, 2147483648
        %v884 = vmul.f32 %v882, 1.442695
        %v885 = vpow.pop %v884
        %v886 = vmul.f32 %v883, 1.442695
        %v887 = vpow.pop %v886
        %v888 = vadd.f32 %v885, 1.0
        %v889 = vadd.f32 %v887, 1.0
        %v890 = vrcp.pop %v888
        %v891 = vmul.f32 %v888, %v890
        %v892 = vsub.f32 1.0, %v891
        %v893 = vmul.f32 %v890, %v892
        %v894 = vadd.f32 %v890, %v893
        %vm895 = vweird.f32 %v888
        %vm896 = vweird.f32 %v890
        %vm897 = vmor %vm895, %vm896
        %v898 = vsel %vm897, %v890, %v894
        %v899 = vand.u32 2147483647, %v888
        %vm900 = vcmp.eq.f32.partialorder %v899, 8.507059e+37
        %v901 = vand.u32 %v888, 2147483648
        %v902 = vor.u32 1.1754944e-38, %v901
        %v903 = vsel %vm900, %v902, %v898
        %v904 = vmul.f32 1.0, %v903
        %v905 = vrcp.pop %v889
        %v906 = vmul.f32 %v889, %v905
        %v907 = vsub.f32 1.0, %v906
        %v908 = vmul.f32 %v905, %v907
        %v909 = vadd.f32 %v905, %v908
        %vm910 = vweird.f32 %v889
        %vm911 = vweird.f32 %v905
        %vm912 = vmor %vm910, %vm911
        %v913 = vsel %vm912, %v905, %v909
        %v914 = vand.u32 2147483647, %v889
        %vm915 = vcmp.eq.f32.partialorder %v914, 8.507059e+37
        %v916 = vand.u32 %v889, 2147483648
        %v917 = vor.u32 1.1754944e-38, %v916
        %v918 = vsel %vm915, %v917, %v913
        %v919 = vmul.f32 1.0, %v918
        %v920 = vtanh.pop %v881
        %v922 = vrot.slane %v815, 7
        %v924 = vmul.f32 %v904, %v922
        %926 = vrot.lane.b32.xlu0 %v920, 64
        %v927 = vpop.permute.xlu0 %926
        %v929 = vmul.f32 %v904, %v927
        %931 = vrot.lane.b32.xlu0 %v929, 64
        %v932 = vpop.permute.xlu0 %931
        %v934 = vadd.f32 %v924, %v932
        %v935 = vtanh.pop %v934
        %937 = vrot.lane.b32.xlu0 %v935, 64
        %v938 = vpop.permute.xlu0 %937
        %v940 = vmul.f32 %v919, %v938
        %v942 = vrot.slane %v940, 3
        %v943 = vsel %vm476, %v942, 0
        %945 = vmatpush.msra.mxu0 0.0
        %946 = vmatpush.msra.mxu0 0.0
        %947 = vmatpush.msra.mxu0 0.0
        %948 = vmatpush.msra.mxu0 0.0
        %949 = vmatpush.msra.mxu0 0.0
        %950 = vmatpush.msra.mxu0 0.0
        %951 = vmatpush.msra.mxu0 0.0
        %952 = vmatpush.msra.mxu0 0.0
        %953 = vmatpush.msra.mxu0 %v474
        %954 = vmatpush.msra.mxu0 %v472
        %955 = vmatpush.msra.mxu0 %v470
        %956 = vmatpush.msra.mxu0 %v468
        %957 = vmatpush.msra.mxu0 %v466
        %958 = vmatpush.msra.mxu0 %v464
        %959 = vmatpush.msra.mxu0 %v462
        %960 = vmatpush.msra.mxu0 %v460
        %961 = vmatmul.f32.gmra.mxu0 %v943
        %v962 = vpop.f32.mrf.mxu0
        %v963 = vadd.f32 0.0, %v962
        %964 = vdwg.mxu0
        %965 = vmatpush.msra.mxu0 0.0
        %966 = vmatpush.msra.mxu0 0.0
        %967 = vmatpush.msra.mxu0 0.0
        %968 = vmatpush.msra.mxu0 0.0
        %969 = vmatpush.msra.mxu0 0.0
        %970 = vmatpush.msra.mxu0 0.0
        %971 = vmatpush.msra.mxu0 0.0
        %972 = vmatpush.msra.mxu0 0.0
        %973 = vmatpush.msra.mxu0 %v475
        %974 = vmatpush.msra.mxu0 %v473
        %975 = vmatpush.msra.mxu0 %v471
        %976 = vmatpush.msra.mxu0 %v469
        %977 = vmatpush.msra.mxu0 %v467
        %978 = vmatpush.msra.mxu0 %v465
        %979 = vmatpush.msra.mxu0 %v463
        %980 = vmatpush.msra.mxu0 %v461
        %981 = vmatmul.f32.gmra.mxu0 %v943
        %v982 = vpop.f32.mrf.mxu0
        %v983 = vadd.f32 0.0, %v982
        %984 = vdwg.mxu0
        %v987 = vrot.slane %v963, 4
        %v988 = vrot.slane %v983, 4
        %v991 = vadd.f32 %v458, %v987
        %v992 = vadd.f32 %v459, %v988
        %v993 = vadd.f32 %v991, %v523
        %v994 = vadd.f32 %v992, %v524
        %v995 = vxor.u32 %v993, 2147483648
        %v996 = vxor.u32 %v994, 2147483648
        %v997 = vmul.f32 %v995, 1.442695
        %v998 = vpow.pop %v997
        %v999 = vmul.f32 %v996, 1.442695
        %v1000 = vpow.pop %v999
        %v1001 = vadd.f32 %v998, 1.0
        %v1002 = vadd.f32 %v1000, 1.0
        %v1003 = vrcp.pop %v1001
        %v1004 = vmul.f32 %v1001, %v1003
        %v1005 = vsub.f32 1.0, %v1004
        %v1006 = vmul.f32 %v1003, %v1005
        %v1007 = vadd.f32 %v1003, %v1006
        %vm1008 = vweird.f32 %v1001
        %vm1009 = vweird.f32 %v1003
        %vm1010 = vmor %vm1008, %vm1009
        %v1011 = vsel %vm1010, %v1003, %v1007
        %v1012 = vand.u32 2147483647, %v1001
        %vm1013 = vcmp.eq.f32.partialorder %v1012, 8.507059e+37
        %v1014 = vand.u32 %v1001, 2147483648
        %v1015 = vor.u32 1.1754944e-38, %v1014
        %v1016 = vsel %vm1013, %v1015, %v1011
        %v1017 = vmul.f32 1.0, %v1016
        %v1018 = vrcp.pop %v1002
        %v1019 = vmul.f32 %v1002, %v1018
        %v1020 = vsub.f32 1.0, %v1019
        %v1021 = vmul.f32 %v1018, %v1020
        %v1022 = vadd.f32 %v1018, %v1021
        %vm1023 = vweird.f32 %v1002
        %vm1024 = vweird.f32 %v1018
        %vm1025 = vmor %vm1023, %vm1024
        %v1026 = vsel %vm1025, %v1018, %v1022
        %v1027 = vand.u32 2147483647, %v1002
        %vm1028 = vcmp.eq.f32.partialorder %v1027, 8.507059e+37
        %v1029 = vand.u32 %v1002, 2147483648
        %v1030 = vor.u32 1.1754944e-38, %v1029
        %v1031 = vsel %vm1028, %v1030, %v1026
        %v1032 = vmul.f32 1.0, %v1031
        %v1033 = vtanh.pop %v994
        %v1035 = vrot.slane %v934, 7
        %v1037 = vmul.f32 %v1017, %v1035
        %1039 = vrot.lane.b32.xlu0 %v1033, 64
        %v1040 = vpop.permute.xlu0 %1039
        %v1042 = vmul.f32 %v1017, %v1040
        %1044 = vrot.lane.b32.xlu0 %v1042, 64
        %v1045 = vpop.permute.xlu0 %1044
        %v1047 = vadd.f32 %v1037, %v1045
        %v1048 = vtanh.pop %v1047
        %1050 = vrot.lane.b32.xlu0 %v1048, 64
        %v1051 = vpop.permute.xlu0 %1050
        %v1053 = vmul.f32 %v1032, %v1051
        %v1055 = vrot.slane %v1053, 4
        %v1056 = vsel %vm476, %v1055, 0
        %1058 = vmatpush.msra.mxu0 0.0
        %1059 = vmatpush.msra.mxu0 0.0
        %1060 = vmatpush.msra.mxu0 0.0
        %1061 = vmatpush.msra.mxu0 0.0
        %1062 = vmatpush.msra.mxu0 0.0
        %1063 = vmatpush.msra.mxu0 0.0
        %1064 = vmatpush.msra.mxu0 0.0
        %1065 = vmatpush.msra.mxu0 0.0
        %1066 = vmatpush.msra.mxu0 %v474
        %1067 = vmatpush.msra.mxu0 %v472
        %1068 = vmatpush.msra.mxu0 %v470
        %1069 = vmatpush.msra.mxu0 %v468
        %1070 = vmatpush.msra.mxu0 %v466
        %1071 = vmatpush.msra.mxu0 %v464
        %1072 = vmatpush.msra.mxu0 %v462
        %1073 = vmatpush.msra.mxu0 %v460
        %1074 = vmatmul.f32.gmra.mxu0 %v1056
        %v1075 = vpop.f32.mrf.mxu0
        %v1076 = vadd.f32 0.0, %v1075
        %1077 = vdwg.mxu0
        %1078 = vmatpush.msra.mxu0 0.0
        %1079 = vmatpush.msra.mxu0 0.0
        %1080 = vmatpush.msra.mxu0 0.0
        %1081 = vmatpush.msra.mxu0 0.0
        %1082 = vmatpush.msra.mxu0 0.0
        %1083 = vmatpush.msra.mxu0 0.0
        %1084 = vmatpush.msra.mxu0 0.0
        %1085 = vmatpush.msra.mxu0 0.0
        %1086 = vmatpush.msra.mxu0 %v475
        %1087 = vmatpush.msra.mxu0 %v473
        %1088 = vmatpush.msra.mxu0 %v471
        %1089 = vmatpush.msra.mxu0 %v469
        %1090 = vmatpush.msra.mxu0 %v467
        %1091 = vmatpush.msra.mxu0 %v465
        %1092 = vmatpush.msra.mxu0 %v463
        %1093 = vmatpush.msra.mxu0 %v461
        %1094 = vmatmul.f32.gmra.mxu0 %v1056
        %v1095 = vpop.f32.mrf.mxu0
        %v1096 = vadd.f32 0.0, %v1095
        %1097 = vdwg.mxu0
        %v1100 = vrot.slane %v1076, 3
        %v1101 = vrot.slane %v1096, 3
        %v1104 = vadd.f32 %v589, %v1100
        %v1105 = vadd.f32 %v590, %v1101
        %v1106 = vadd.f32 %v1104, %v523
        %v1107 = vadd.f32 %v1105, %v524
        %v1108 = vxor.u32 %v1106, 2147483648
        %v1109 = vxor.u32 %v1107, 2147483648
        %v1110 = vmul.f32 %v1108, 1.442695
        %v1111 = vpow.pop %v1110
        %v1112 = vmul.f32 %v1109, 1.442695
        %v1113 = vpow.pop %v1112
        %v1114 = vadd.f32 %v1111, 1.0
        %v1115 = vadd.f32 %v1113, 1.0
        %v1116 = vrcp.pop %v1114
        %v1117 = vmul.f32 %v1114, %v1116
        %v1118 = vsub.f32 1.0, %v1117
        %v1119 = vmul.f32 %v1116, %v1118
        %v1120 = vadd.f32 %v1116, %v1119
        %vm1121 = vweird.f32 %v1114
        %vm1122 = vweird.f32 %v1116
        %vm1123 = vmor %vm1121, %vm1122
        %v1124 = vsel %vm1123, %v1116, %v1120
        %v1125 = vand.u32 2147483647, %v1114
        %vm1126 = vcmp.eq.f32.partialorder %v1125, 8.507059e+37
        %v1127 = vand.u32 %v1114, 2147483648
        %v1128 = vor.u32 1.1754944e-38, %v1127
        %v1129 = vsel %vm1126, %v1128, %v1124
        %v1130 = vmul.f32 1.0, %v1129
        %v1131 = vrcp.pop %v1115
        %v1132 = vmul.f32 %v1115, %v1131
        %v1133 = vsub.f32 1.0, %v1132
        %v1134 = vmul.f32 %v1131, %v1133
        %v1135 = vadd.f32 %v1131, %v1134
        %vm1136 = vweird.f32 %v1115
        %vm1137 = vweird.f32 %v1131
        %vm1138 = vmor %vm1136, %vm1137
        %v1139 = vsel %vm1138, %v1131, %v1135
        %v1140 = vand.u32 2147483647, %v1115
        %vm1141 = vcmp.eq.f32.partialorder %v1140, 8.507059e+37
        %v1142 = vand.u32 %v1115, 2147483648
        %v1143 = vor.u32 1.1754944e-38, %v1142
        %v1144 = vsel %vm1141, %v1143, %v1139
        %v1145 = vmul.f32 1.0, %v1144
        %v1146 = vtanh.pop %v1107
        %v1148 = vrot.slane %v1047, 7
        %v1150 = vmul.f32 %v1130, %v1148
        %1152 = vrot.lane.b32.xlu0 %v1146, 64
        %v1153 = vpop.permute.xlu0 %1152
        %v1155 = vmul.f32 %v1130, %v1153
        %1157 = vrot.lane.b32.xlu0 %v1155, 64
        %v1158 = vpop.permute.xlu0 %1157
        %v1160 = vadd.f32 %v1150, %v1158
        %v1161 = vtanh.pop %v1160
        %1163 = vrot.lane.b32.xlu0 %v1161, 64
        %v1164 = vpop.permute.xlu0 %1163
        %v1166 = vmul.f32 %v1145, %v1164
        %v1168 = vrot.slane %v1166, 5
        %v1169 = vsel %vm476, %v1168, 0
        %1171 = vmatpush.msra.mxu0 0.0
        %1172 = vmatpush.msra.mxu0 0.0
        %1173 = vmatpush.msra.mxu0 0.0
        %1174 = vmatpush.msra.mxu0 0.0
        %1175 = vmatpush.msra.mxu0 0.0
        %1176 = vmatpush.msra.mxu0 0.0
        %1177 = vmatpush.msra.mxu0 0.0
        %1178 = vmatpush.msra.mxu0 0.0
        %1179 = vmatpush.msra.mxu0 %v474
        %1180 = vmatpush.msra.mxu0 %v472
        %1181 = vmatpush.msra.mxu0 %v470
        %1182 = vmatpush.msra.mxu0 %v468
        %1183 = vmatpush.msra.mxu0 %v466
        %1184 = vmatpush.msra.mxu0 %v464
        %1185 = vmatpush.msra.mxu0 %v462
        %1186 = vmatpush.msra.mxu0 %v460
        %1187 = vmatmul.f32.gmra.mxu0 %v1169
        %v1188 = vpop.f32.mrf.mxu0
        %v1189 = vadd.f32 0.0, %v1188
        %1190 = vdwg.mxu0
        %1191 = vmatpush.msra.mxu0 0.0
        %1192 = vmatpush.msra.mxu0 0.0
        %1193 = vmatpush.msra.mxu0 0.0
        %1194 = vmatpush.msra.mxu0 0.0
        %1195 = vmatpush.msra.mxu0 0.0
        %1196 = vmatpush.msra.mxu0 0.0
        %1197 = vmatpush.msra.mxu0 0.0
        %1198 = vmatpush.msra.mxu0 0.0
        %1199 = vmatpush.msra.mxu0 %v475
        %1200 = vmatpush.msra.mxu0 %v473
        %1201 = vmatpush.msra.mxu0 %v471
        %1202 = vmatpush.msra.mxu0 %v469
        %1203 = vmatpush.msra.mxu0 %v467
        %1204 = vmatpush.msra.mxu0 %v465
        %1205 = vmatpush.msra.mxu0 %v463
        %1206 = vmatpush.msra.mxu0 %v461
        %1207 = vmatmul.f32.gmra.mxu0 %v1169
        %v1208 = vpop.f32.mrf.mxu0
        %v1209 = vadd.f32 0.0, %v1208
        %1210 = vdwg.mxu0
        %v1213 = vrot.slane %v1189, 2
        %v1214 = vrot.slane %v1209, 2
        %v1217 = vadd.f32 %v707, %v1213
        %v1218 = vadd.f32 %v708, %v1214
        %v1219 = vadd.f32 %v1217, %v523
        %v1220 = vadd.f32 %v1218, %v524
        %v1221 = vxor.u32 %v1219, 2147483648
        %v1222 = vxor.u32 %v1220, 2147483648
        %v1223 = vmul.f32 %v1221, 1.442695
        %v1224 = vpow.pop %v1223
        %v1225 = vmul.f32 %v1222, 1.442695
        %v1226 = vpow.pop %v1225
        %v1227 = vadd.f32 %v1224, 1.0
        %v1228 = vadd.f32 %v1226, 1.0
        %v1229 = vrcp.pop %v1227
        %v1230 = vmul.f32 %v1227, %v1229
        %v1231 = vsub.f32 1.0, %v1230
        %v1232 = vmul.f32 %v1229, %v1231
        %v1233 = vadd.f32 %v1229, %v1232
        %vm1234 = vweird.f32 %v1227
        %vm1235 = vweird.f32 %v1229
        %vm1236 = vmor %vm1234, %vm1235
        %v1237 = vsel %vm1236, %v1229, %v1233
        %v1238 = vand.u32 2147483647, %v1227
        %vm1239 = vcmp.eq.f32.partialorder %v1238, 8.507059e+37
        %v1240 = vand.u32 %v1227, 2147483648
        %v1241 = vor.u32 1.1754944e-38, %v1240
        %v1242 = vsel %vm1239, %v1241, %v1237
        %v1243 = vmul.f32 1.0, %v1242
        %v1244 = vrcp.pop %v1228
        %v1245 = vmul.f32 %v1228, %v1244
        %v1246 = vsub.f32 1.0, %v1245
        %v1247 = vmul.f32 %v1244, %v1246
        %v1248 = vadd.f32 %v1244, %v1247
        %vm1249 = vweird.f32 %v1228
        %vm1250 = vweird.f32 %v1244
        %vm1251 = vmor %vm1249, %vm1250
        %v1252 = vsel %vm1251, %v1244, %v1248
        %v1253 = vand.u32 2147483647, %v1228
        %vm1254 = vcmp.eq.f32.partialorder %v1253, 8.507059e+37
        %v1255 = vand.u32 %v1228, 2147483648
        %v1256 = vor.u32 1.1754944e-38, %v1255
        %v1257 = vsel %vm1254, %v1256, %v1252
        %v1258 = vmul.f32 1.0, %v1257
        %v1259 = vtanh.pop %v1220
        %v1261 = vrot.slane %v1160, 7
        %v1263 = vmul.f32 %v1243, %v1261
        %1265 = vrot.lane.b32.xlu0 %v1259, 64
        %v1266 = vpop.permute.xlu0 %1265
        %v1268 = vmul.f32 %v1243, %v1266
        %1270 = vrot.lane.b32.xlu0 %v1268, 64
        %v1271 = vpop.permute.xlu0 %1270
        %v1273 = vadd.f32 %v1263, %v1271
        %v1274 = vtanh.pop %v1273
        %1276 = vrot.lane.b32.xlu0 %v1274, 64
        %v1277 = vpop.permute.xlu0 %1276
        %v1279 = vmul.f32 %v1258, %v1277
        %v1281 = vrot.slane %v1279, 6
        %v1282 = vsel %vm476, %v1281, 0
        %1284 = vmatpush.msra.mxu0 0.0
        %1285 = vmatpush.msra.mxu0 0.0
        %1286 = vmatpush.msra.mxu0 0.0
        %1287 = vmatpush.msra.mxu0 0.0
        %1288 = vmatpush.msra.mxu0 0.0
        %1289 = vmatpush.msra.mxu0 0.0
        %1290 = vmatpush.msra.mxu0 0.0
        %1291 = vmatpush.msra.mxu0 0.0
        %1292 = vmatpush.msra.mxu0 %v474
        %1293 = vmatpush.msra.mxu0 %v472
        %1294 = vmatpush.msra.mxu0 %v470
        %1295 = vmatpush.msra.mxu0 %v468
        %1296 = vmatpush.msra.mxu0 %v466
        %1297 = vmatpush.msra.mxu0 %v464
        %1298 = vmatpush.msra.mxu0 %v462
        %1299 = vmatpush.msra.mxu0 %v460
        %1300 = vmatmul.f32.gmra.mxu0 %v1282
        %v1301 = vpop.f32.mrf.mxu0
        %v1302 = vadd.f32 0.0, %v1301
        %1303 = vdwg.mxu0
        %1304 = vmatpush.msra.mxu0 0.0
        %1305 = vmatpush.msra.mxu0 0.0
        %1306 = vmatpush.msra.mxu0 0.0
        %1307 = vmatpush.msra.mxu0 0.0
        %1308 = vmatpush.msra.mxu0 0.0
        %1309 = vmatpush.msra.mxu0 0.0
        %1310 = vmatpush.msra.mxu0 0.0
        %1311 = vmatpush.msra.mxu0 0.0
        %1312 = vmatpush.msra.mxu0 %v475
        %1313 = vmatpush.msra.mxu0 %v473
        %1314 = vmatpush.msra.mxu0 %v471
        %1315 = vmatpush.msra.mxu0 %v469
        %1316 = vmatpush.msra.mxu0 %v467
        %1317 = vmatpush.msra.mxu0 %v465
        %1318 = vmatpush.msra.mxu0 %v463
        %1319 = vmatpush.msra.mxu0 %v461
        %1320 = vmatmul.f32.gmra.mxu0 %v1282
        %v1321 = vpop.f32.mrf.mxu0
        %v1322 = vadd.f32 0.0, %v1321
        %1323 = vdwg.mxu0
        %v1326 = vrot.slane %v1302, 1
        %v1327 = vrot.slane %v1322, 1
        %v1330 = vadd.f32 %v826, %v1326
        %v1331 = vadd.f32 %v827, %v1327
        %v1332 = vadd.f32 %v1330, %v523
        %v1333 = vadd.f32 %v1331, %v524
        %v1334 = vxor.u32 %v1332, 2147483648
        %v1335 = vxor.u32 %v1333, 2147483648
        %v1336 = vmul.f32 %v1334, 1.442695
        %v1337 = vpow.pop %v1336
        %v1338 = vmul.f32 %v1335, 1.442695
        %v1339 = vpow.pop %v1338
        %v1340 = vadd.f32 %v1337, 1.0
        %v1341 = vadd.f32 %v1339, 1.0
        %v1342 = vrcp.pop %v1340
        %v1343 = vmul.f32 %v1340, %v1342
        %v1344 = vsub.f32 1.0, %v1343
        %v1345 = vmul.f32 %v1342, %v1344
        %v1346 = vadd.f32 %v1342, %v1345
        %vm1347 = vweird.f32 %v1340
        %vm1348 = vweird.f32 %v1342
        %vm1349 = vmor %vm1347, %vm1348
        %v1350 = vsel %vm1349, %v1342, %v1346
        %v1351 = vand.u32 2147483647, %v1340
        %vm1352 = vcmp.eq.f32.partialorder %v1351, 8.507059e+37
        %v1353 = vand.u32 %v1340, 2147483648
        %v1354 = vor.u32 1.1754944e-38, %v1353
        %v1355 = vsel %vm1352, %v1354, %v1350
        %v1356 = vmul.f32 1.0, %v1355
        %v1357 = vrcp.pop %v1341
        %v1358 = vmul.f32 %v1341, %v1357
        %v1359 = vsub.f32 1.0, %v1358
        %v1360 = vmul.f32 %v1357, %v1359
        %v1361 = vadd.f32 %v1357, %v1360
        %vm1362 = vweird.f32 %v1341
        %vm1363 = vweird.f32 %v1357
        %vm1364 = vmor %vm1362, %vm1363
        %v1365 = vsel %vm1364, %v1357, %v1361
        %v1366 = vand.u32 2147483647, %v1341
        %vm1367 = vcmp.eq.f32.partialorder %v1366, 8.507059e+37
        %v1368 = vand.u32 %v1341, 2147483648
        %v1369 = vor.u32 1.1754944e-38, %v1368
        %v1370 = vsel %vm1367, %v1369, %v1365
        %v1371 = vmul.f32 1.0, %v1370
        %v1372 = vtanh.pop %v1333
        %v1374 = vrot.slane %v1273, 7
        %v1376 = vmul.f32 %v1356, %v1374
        %1378 = vrot.lane.b32.xlu0 %v1372, 64
        %v1379 = vpop.permute.xlu0 %1378
        %v1381 = vmul.f32 %v1356, %v1379
        %1383 = vrot.lane.b32.xlu0 %v1381, 64
        %v1384 = vpop.permute.xlu0 %1383
        %v1386 = vadd.f32 %v1376, %v1384
        %v1387 = vtanh.pop %v1386
        %1389 = vrot.lane.b32.xlu0 %v1387, 64
        %v1390 = vpop.permute.xlu0 %1389
        %v1392 = vmul.f32 %v1371, %v1390
        %v1393 = vsel %vm344, %v584, %v702
        %v1394 = vsel %vm346, %v1393, %v821
        %v1395 = vsel %vm348, %v1394, %v940
        %v1396 = vsel %vm350, %v1395, %v1053
        %v1397 = vsel %vm352, %v1396, %v1166
        %v1398 = vsel %vm354, %v1397, %v1279
        %v1399 = vsel %vm356, %v1398, %v1392
        %v1401 = vrot.slane %v1392, 7
        %v1403 = vrot.slane %v1279, 5
        %v1405 = vrot.slane %v1166, 3
        %v1407 = vrot.slane %v1053, 1
        %v1409 = vrot.slane %v940, 7
        %v1411 = vrot.slane %v821, 5
        %v1413 = vrot.slane %v702, 3
        %v1415 = vrot.slane %v584, 1
        %v1417 = vsel %vm344, %v1401, %v1403
        %v1418 = vsel %vm346, %v1417, %v1405
        %v1419 = vsel %vm348, %v1418, %v1407
        %v1420 = vsel %vm350, %v1419, %v1409
        %v1421 = vsel %vm352, %v1420, %v1411
        %v1422 = vsel %vm354, %v1421, %v1413
        %v1423 = vsel %vm356, %v1422, %v1415
        %v1424 = vld [vmem:[%s5] sm:$0xff]
        %v1425 = vld [vmem:[%s5 + $0x8] sm:$0xff]
        %v1426 = vld [vmem:[%s5 + $0x10] sm:$0xff]
        %v1427 = vld [vmem:[%s5 + $0x18] sm:$0xff]
        %v1428 = vld [vmem:[%s5 + $0x20] sm:$0xff]
        %v1429 = vld [vmem:[%s5 + $0x28] sm:$0xff]
        %v1430 = vld [vmem:[%s5 + $0x30] sm:$0xff]
        %v1431 = vld [vmem:[%s5 + $0x38] sm:$0xff]
        %1433 = vrot.lane.b32.xlu0 %v1423, 96
        %v1434 = vpop.permute.xlu0 %1433
        %vm1435 = vcmask 261120
        %v1436 = vsel %vm1435, %v1434, 0
        %1438 = vmatpush.msra.mxu0 0.0
        %1439 = vmatpush.msra.mxu0 0.0
        %1440 = vmatpush.msra.mxu0 0.0
        %1441 = vmatpush.msra.mxu0 0.0
        %1442 = vmatpush.msra.mxu0 0.0
        %1443 = vmatpush.msra.mxu0 0.0
        %1444 = vmatpush.msra.mxu0 0.0
        %1445 = vmatpush.msra.mxu0 0.0
        %1446 = vmatpush.msra.mxu0 0.0
        %1447 = vmatpush.msra.mxu0 0.0
        %1448 = vmatpush.msra.mxu0 0.0
        %1449 = vmatpush.msra.mxu0 0.0
        %1450 = vmatpush.msra.mxu0 %v1431
        %1451 = vmatpush.msra.mxu0 %v1430
        %1452 = vmatpush.msra.mxu0 %v1429
        %1453 = vmatpush.msra.mxu0 %v1428
        %1454 = vmatmul.f32.gmra.mxu0 %v1436
        %v1455 = vpop.f32.mrf.mxu0
        %v1456 = vadd.f32 0.0, %v1455
        %1457 = vdwg.mxu0
        %v1459 = vsel %vm1435, %v1399, 0
        %1461 = vmatpush.msra.mxu0 0.0
        %1462 = vmatpush.msra.mxu0 0.0
        %1463 = vmatpush.msra.mxu0 0.0
        %1464 = vmatpush.msra.mxu0 0.0
        %1465 = vmatpush.msra.mxu0 0.0
        %1466 = vmatpush.msra.mxu0 0.0
        %1467 = vmatpush.msra.mxu0 0.0
        %1468 = vmatpush.msra.mxu0 0.0
        %1469 = vmatpush.msra.mxu0 0.0
        %1470 = vmatpush.msra.mxu0 0.0
        %1471 = vmatpush.msra.mxu0 0.0
        %1472 = vmatpush.msra.mxu0 0.0
        %1473 = vmatpush.msra.mxu0 %v1427
        %1474 = vmatpush.msra.mxu0 %v1426
        %1475 = vmatpush.msra.mxu0 %v1425
        %1476 = vmatpush.msra.mxu0 %v1424
        %1477 = vmatmul.f32.gmra.mxu0 %v1459
        %v1478 = vpop.f32.mrf.mxu0
        %v1479 = vadd.f32 %v1456, %v1478
        %1480 = vdwg.mxu0
        %v1482 = vperm.slane %v451, 0
        %v1484 = vadd.f32 %v1479, %v1482
        %vm1485 = vcmask 39936
        %v1486 = vsel %vm1485, %v1484, -inf
        %1487 = vmax.xlane.f32.xlu0 %v1486
        %v1488 = vpop.xlane.xlu0 %1487
        %v1489 = vsub.f32 %v1484, %v1488
        %v1490 = vmul.f32 %v1489, 1.442695
        %v1491 = vpow.pop %v1490
        %v1492 = vsel %vm1485, %v1491, 0.0
        %1493 = vadd.xlane.f32.xlu0 %v1492
        %v1494 = vpop.xlane.xlu0 %1493
        %v1495 = vlog2.pop %v1494
        %v1496 = vmul.f32 %v1495, 0.6931472
        %v1497 = vsub.f32 %v1489, %v1496
        %v1498 = vlaneseq
        %v1499 = vshrl.u32 %v1498, 7
        %v1500 = vlaneseq
        %v1501 = vand.u32 %v1500, 127
        %vm1502 = vcmp.eq.s32.totalorder %v1499, %v1501
        %vm1503 = vcmp.eq.s32.totalorder %v1499, 3
        %v1504 = vsel %vm1503, 0.0, -10000.0
        %v1505 = vld [vmem:[%s6] sm:$0x1f]
        %v1506 = vadd.f32 %v1504, %v1505
        %vm1507 = vcmask 36864
        %v1508 = vsel %vm1507, %v1506, -inf
        %v1509 = vrot.slane %v1508, 4
        %v1510 = vmax.f32 %v1508, %v1509
        %v1511 = vrot.slane %v1510, 2
        %v1512 = vmax.f32 %v1510, %v1511
        %v1513 = vrot.slane %v1512, 1
        %v1514 = vmax.f32 %v1512, %v1513
        %v1515 = vadd.f32 %v1514, %v1497
        %v1516 = vperm.slane %v1515, 0
        %v1517 = vsel %vm1502, %v1516, 0.0
        %v1518 = vsel %vm1507, %v1517, 0.0
        %1519 = vadd.xlane.f32.xlu0 %v1518
        %v1520 = vpop.xlane.xlu0 %1519
        %v1521 = vadd.f32 %v1520, %v1505
        %v1522 = vsel %vm1507, %v1521, -inf
        %v1523 = vrot.slane %v1522, 4
        %v1524 = vmax.f32 %v1522, %v1523
        %v1525 = vrot.slane %v1524, 2
        %v1526 = vmax.f32 %v1524, %v1525
        %v1527 = vrot.slane %v1526, 1
        %v1528 = vmax.f32 %v1526, %v1527
        %vm1529 = vcmp.eq.f32.partialorder %v1521, %v1528
        %v1530 = vsel %vm1529, %v1499, 5
        %v1531 = vsel %vm1507, %v1530, 2147483647
        %v1532 = vrot.slane %v1531, 4
        %vm1533 = vcmp.lt.s32.totalorder %v1531, %v1532
        %v1534 = vsel %vm1533, %v1531, %v1532
        %v1535 = vrot.slane %v1534, 2
        %vm1536 = vcmp.lt.s32.totalorder %v1534, %v1535
        %v1537 = vsel %vm1536, %v1534, %v1535
        %v1538 = vrot.slane %v1537, 1
        %vm1539 = vcmp.lt.s32.totalorder %v1537, %v1538
        %v1540 = vsel %vm1539, %v1537, %v1538
        %v1541 = vadd.f32 %v1528, %v1497
        %v1542 = vperm.slane %v1541, 1
        %v1543 = vsel %vm1502, %v1542, 0.0
        %v1544 = vsel %vm1507, %v1543, 0.0
        %1545 = vadd.xlane.f32.xlu0 %v1544
        %v1546 = vpop.xlane.xlu0 %1545
        %v1547 = vadd.f32 %v1546, %v1505
        %v1548 = vsel %vm1507, %v1547, -inf
        %v1549 = vrot.slane %v1548, 4
        %v1550 = vmax.f32 %v1548, %v1549
        %v1551 = vrot.slane %v1550, 2
        %v1552 = vmax.f32 %v1550, %v1551
        %v1553 = vrot.slane %v1552, 1
        %v1554 = vmax.f32 %v1552, %v1553
        %vm1555 = vcmp.eq.f32.partialorder %v1547, %v1554
        %v1556 = vsel %vm1555, %v1499, 5
        %v1557 = vsel %vm1507, %v1556, 2147483647
        %v1558 = vrot.slane %v1557, 4
        %vm1559 = vcmp.lt.s32.totalorder %v1557, %v1558
        %v1560 = vsel %vm1559, %v1557, %v1558
        %v1561 = vrot.slane %v1560, 2
        %vm1562 = vcmp.lt.s32.totalorder %v1560, %v1561
        %v1563 = vsel %vm1562, %v1560, %v1561
        %v1564 = vrot.slane %v1563, 1
        %vm1565 = vcmp.lt.s32.totalorder %v1563, %v1564
        %v1566 = vsel %vm1565, %v1563, %v1564
        %v1567 = vadd.f32 %v1554, %v1497
        %v1568 = vperm.slane %v1567, 2
        %v1569 = vsel %vm1502, %v1568, 0.0
        %v1570 = vsel %vm1507, %v1569, 0.0
        %1571 = vadd.xlane.f32.xlu0 %v1570
        %v1572 = vpop.xlane.xlu0 %1571
        %v1573 = vadd.f32 %v1572, %v1505
        %v1574 = vsel %vm1507, %v1573, -inf
        %v1575 = vrot.slane %v1574, 4
        %v1576 = vmax.f32 %v1574, %v1575
        %v1577 = vrot.slane %v1576, 2
        %v1578 = vmax.f32 %v1576, %v1577
        %v1579 = vrot.slane %v1578, 1
        %v1580 = vmax.f32 %v1578, %v1579
        %vm1581 = vcmp.eq.f32.partialorder %v1573, %v1580
        %v1582 = vsel %vm1581, %v1499, 5
        %v1583 = vsel %vm1507, %v1582, 2147483647
        %v1584 = vrot.slane %v1583, 4
        %vm1585 = vcmp.lt.s32.totalorder %v1583, %v1584
        %v1586 = vsel %vm1585, %v1583, %v1584
        %v1587 = vrot.slane %v1586, 2
        %vm1588 = vcmp.lt.s32.totalorder %v1586, %v1587
        %v1589 = vsel %vm1588, %v1586, %v1587
        %v1590 = vrot.slane %v1589, 1
        %vm1591 = vcmp.lt.s32.totalorder %v1589, %v1590
        %v1592 = vsel %vm1591, %v1589, %v1590
        %v1593 = vadd.f32 %v1580, %v1497
        %v1594 = vperm.slane %v1593, 3
        %v1595 = vsel %vm1502, %v1594, 0.0
        %v1596 = vsel %vm1507, %v1595, 0.0
        %1597 = vadd.xlane.f32.xlu0 %v1596
        %v1598 = vpop.xlane.xlu0 %1597
        %v1599 = vadd.f32 %v1598, %v1505
        %v1600 = vsel %vm1507, %v1599, -inf
        %v1601 = vrot.slane %v1600, 4
        %v1602 = vmax.f32 %v1600, %v1601
        %v1603 = vrot.slane %v1602, 2
        %v1604 = vmax.f32 %v1602, %v1603
        %v1605 = vrot.slane %v1604, 1
        %v1606 = vmax.f32 %v1604, %v1605
        %vm1607 = vcmp.eq.f32.partialorder %v1599, %v1606
        %v1608 = vsel %vm1607, %v1499, 5
        %v1609 = vsel %vm1507, %v1608, 2147483647
        %v1610 = vrot.slane %v1609, 4
        %vm1611 = vcmp.lt.s32.totalorder %v1609, %v1610
        %v1612 = vsel %vm1611, %v1609, %v1610
        %v1613 = vrot.slane %v1612, 2
        %vm1614 = vcmp.lt.s32.totalorder %v1612, %v1613
        %v1615 = vsel %vm1614, %v1612, %v1613
        %v1616 = vrot.slane %v1615, 1
        %vm1617 = vcmp.lt.s32.totalorder %v1615, %v1616
        %v1618 = vsel %vm1617, %v1615, %v1616
        %v1619 = vadd.f32 %v1606, %v1497
        %v1620 = vperm.slane %v1619, 4
        %v1621 = vsel %vm1502, %v1620, 0.0
        %v1622 = vsel %vm1507, %v1621, 0.0
        %1623 = vadd.xlane.f32.xlu0 %v1622
        %v1624 = vpop.xlane.xlu0 %1623
        %v1625 = vadd.f32 %v1624, %v1505
        %v1626 = vsel %vm1507, %v1625, -inf
        %v1627 = vrot.slane %v1626, 4
        %v1628 = vmax.f32 %v1626, %v1627
        %v1629 = vrot.slane %v1628, 2
        %v1630 = vmax.f32 %v1628, %v1629
        %v1631 = vrot.slane %v1630, 1
        %v1632 = vmax.f32 %v1630, %v1631
        %vm1633 = vcmp.eq.f32.partialorder %v1625, %v1632
        %v1634 = vsel %vm1633, %v1499, 5
        %v1635 = vsel %vm1507, %v1634, 2147483647
        %v1636 = vrot.slane %v1635, 4
        %vm1637 = vcmp.lt.s32.totalorder %v1635, %v1636
        %v1638 = vsel %vm1637, %v1635, %v1636
        %v1639 = vrot.slane %v1638, 2
        %vm1640 = vcmp.lt.s32.totalorder %v1638, %v1639
        %v1641 = vsel %vm1640, %v1638, %v1639
        %v1642 = vrot.slane %v1641, 1
        %vm1643 = vcmp.lt.s32.totalorder %v1641, %v1642
        %v1644 = vsel %vm1643, %v1641, %v1642
        %v1645 = vadd.f32 %v1632, %v1497
        %v1646 = vperm.slane %v1645, 5
        %v1647 = vsel %vm1502, %v1646, 0.0
        %v1648 = vsel %vm1507, %v1647, 0.0
        %1649 = vadd.xlane.f32.xlu0 %v1648
        %v1650 = vpop.xlane.xlu0 %1649
        %v1651 = vadd.f32 %v1650, %v1505
        %v1652 = vsel %vm1507, %v1651, -inf
        %v1653 = vrot.slane %v1652, 4
        %v1654 = vmax.f32 %v1652, %v1653
        %v1655 = vrot.slane %v1654, 2
        %v1656 = vmax.f32 %v1654, %v1655
        %v1657 = vrot.slane %v1656, 1
        %v1658 = vmax.f32 %v1656, %v1657
        %vm1659 = vcmp.eq.f32.partialorder %v1651, %v1658
        %v1660 = vsel %vm1659, %v1499, 5
        %v1661 = vsel %vm1507, %v1660, 2147483647
        %v1662 = vrot.slane %v1661, 4
        %vm1663 = vcmp.lt.s32.totalorder %v1661, %v1662
        %v1664 = vsel %vm1663, %v1661, %v1662
        %v1665 = vrot.slane %v1664, 2
        %vm1666 = vcmp.lt.s32.totalorder %v1664, %v1665
        %v1667 = vsel %vm1666, %v1664, %v1665
        %v1668 = vrot.slane %v1667, 1
        %vm1669 = vcmp.lt.s32.totalorder %v1667, %v1668
        %v1670 = vsel %vm1669, %v1667, %v1668
        %v1671 = vadd.f32 %v1658, %v1497
        %v1672 = vperm.slane %v1671, 6
        %v1673 = vsel %vm1502, %v1672, 0.0
        %v1674 = vsel %vm1507, %v1673, 0.0
        %1675 = vadd.xlane.f32.xlu0 %v1674
        %v1676 = vpop.xlane.xlu0 %1675
        %v1677 = vadd.f32 %v1676, %v1505
        %v1678 = vsel %vm1507, %v1677, -inf
        %v1679 = vrot.slane %v1678, 4
        %v1680 = vmax.f32 %v1678, %v1679
        %v1681 = vrot.slane %v1680, 2
        %v1682 = vmax.f32 %v1680, %v1681
        %v1683 = vrot.slane %v1682, 1
        %v1684 = vmax.f32 %v1682, %v1683
        %vm1685 = vcmp.eq.f32.partialorder %v1677, %v1684
        %v1686 = vsel %vm1685, %v1499, 5
        %v1687 = vsel %vm1507, %v1686, 2147483647
        %v1688 = vrot.slane %v1687, 4
        %vm1689 = vcmp.lt.s32.totalorder %v1687, %v1688
        %v1690 = vsel %vm1689, %v1687, %v1688
        %v1691 = vrot.slane %v1690, 2
        %vm1692 = vcmp.lt.s32.totalorder %v1690, %v1691
        %v1693 = vsel %vm1692, %v1690, %v1691
        %v1694 = vrot.slane %v1693, 1
        %vm1695 = vcmp.lt.s32.totalorder %v1693, %v1694
        %v1696 = vsel %vm1695, %v1693, %v1694
        %v1697 = vadd.f32 %v1684, %v1497
        %v1698 = vperm.slane %v1697, 7
        %v1699 = vsel %vm1502, %v1698, 0.0
        %v1700 = vsel %vm1507, %v1699, 0.0
        %1701 = vadd.xlane.f32.xlu0 %v1700
        %v1702 = vpop.xlane.xlu0 %1701
        %v1703 = vadd.f32 %v1702, %v1505
        %vm1704 = vcmask 36896
        %v1705 = vsel %vm1704, %v1703, -inf
        %v1706 = vrot.slane %v1705, 4
        %v1707 = vmax.f32 %v1705, %v1706
        %v1708 = vrot.slane %v1707, 2
        %v1709 = vmax.f32 %v1707, %v1708
        %v1710 = vrot.slane %v1709, 1
        %v1711 = vmax.f32 %v1709, %v1710
        %vm1712 = vcmp.eq.f32.partialorder %v1703, %v1711
        %v1713 = vsel %vm1712, %v1499, 5
        %v1714 = vsel %vm1704, %v1713, 2147483647
        %v1715 = vrot.slane %v1714, 4
        %vm1716 = vcmp.lt.s32.totalorder %v1714, %v1715
        %v1717 = vsel %vm1716, %v1714, %v1715
        %v1718 = vrot.slane %v1717, 2
        %vm1719 = vcmp.lt.s32.totalorder %v1717, %v1718
        %v1720 = vsel %vm1719, %v1717, %v1718
        %v1721 = vrot.slane %v1720, 1
        %vm1722 = vcmp.lt.s32.totalorder %v1720, %v1721
        %v1723 = vsel %vm1722, %v1720, %v1721
        %1725 = vrot.lane.b32.xlu0 %v1711, 124
        %v1726 = vpop.permute.xlu0 %1725
        %vm1728 = vcmask 0
        %1729 = vst.msk [vmem:[%s290] sm:$0x1] %vm1728, %v1726
        %vm1730 = vcmp.eq.s32.totalorder %v1501, 7
        %1731 = vset.pattern.permute.xlu0 4
        %1732 = vperm.xlu0 %1731, %v1723
        %v1733 = vpop.permute.xlu0 %1732
        %v1734 = vsel %vm1730, %v1733, 0
        %vm1735 = vcmp.eq.s32.totalorder %v1501, %v1733
        %v1736 = vsel %vm1735, %v1696, 0
        %v1737 = vsel %vm1485, %v1736, 0
        %v1738 = vand.u32 %v1737, 65535
        %v1739 = vshrl.u32 %v1737, 16
        %v1740 = vcvt.s32.f32 %v1738
        %v1741 = vcvt.s32.f32 %v1739
        %1742 = vadd.xlane.f32.xlu0 %v1740
        %v1743 = vpop.xlane.xlu0 %1742
        %1744 = vadd.xlane.f32.xlu0 %v1741
        %v1745 = vpop.xlane.xlu0 %1744
        %v1746 = vcvt.f32.s32 %v1743
        %v1747 = vcvt.f32.s32 %v1745
        %v1748 = vshll.u32 %v1747, 16
        %v1749 = vadd.s32 %v1748, %v1746
        %vm1750 = vcmp.eq.s32.totalorder %v1501, 6
        %v1751 = vsel %vm1750, %v1749, %v1734
        %vm1752 = vcmp.eq.s32.totalorder %v1501, %v1749
        %v1753 = vsel %vm1752, %v1670, 0
        %v1754 = vsel %vm1485, %v1753, 0
        %v1755 = vand.u32 %v1754, 65535
        %v1756 = vshrl.u32 %v1754, 16
        %v1757 = vcvt.s32.f32 %v1755
        %v1758 = vcvt.s32.f32 %v1756
        %1759 = vadd.xlane.f32.xlu0 %v1757
        %v1760 = vpop.xlane.xlu0 %1759
        %1761 = vadd.xlane.f32.xlu0 %v1758
        %v1762 = vpop.xlane.xlu0 %1761
        %v1763 = vcvt.f32.s32 %v1760
        %v1764 = vcvt.f32.s32 %v1762
        %v1765 = vshll.u32 %v1764, 16
        %v1766 = vadd.s32 %v1765, %v1763
        %vm1767 = vcmp.eq.s32.totalorder %v1501, 5
        %v1768 = vsel %vm1767, %v1766, %v1751
        %vm1769 = vcmp.eq.s32.totalorder %v1501, %v1766
        %v1770 = vsel %vm1769, %v1644, 0
        %v1771 = vsel %vm1485, %v1770, 0
        %v1772 = vand.u32 %v1771, 65535
        %v1773 = vshrl.u32 %v1771, 16
        %v1774 = vcvt.s32.f32 %v1772
        %v1775 = vcvt.s32.f32 %v1773
        %1776 = vadd.xlane.f32.xlu0 %v1774
        %v1777 = vpop.xlane.xlu0 %1776
        %1778 = vadd.xlane.f32.xlu0 %v1775
        %v1779 = vpop.xlane.xlu0 %1778
        %v1780 = vcvt.f32.s32 %v1777
        %v1781 = vcvt.f32.s32 %v1779
        %v1782 = vshll.u32 %v1781, 16
        %v1783 = vadd.s32 %v1782, %v1780
        %vm1784 = vcmp.eq.s32.totalorder %v1501, 4
        %v1785 = vsel %vm1784, %v1783, %v1768
        %vm1786 = vcmp.eq.s32.totalorder %v1501, %v1783
        %v1787 = vsel %vm1786, %v1618, 0
        %v1788 = vsel %vm1485, %v1787, 0
        %v1789 = vand.u32 %v1788, 65535
        %v1790 = vshrl.u32 %v1788, 16
        %v1791 = vcvt.s32.f32 %v1789
        %v1792 = vcvt.s32.f32 %v1790
        %1793 = vadd.xlane.f32.xlu0 %v1791
        %v1794 = vpop.xlane.xlu0 %1793
        %1795 = vadd.xlane.f32.xlu0 %v1792
        %v1796 = vpop.xlane.xlu0 %1795
        %v1797 = vcvt.f32.s32 %v1794
        %v1798 = vcvt.f32.s32 %v1796
        %v1799 = vshll.u32 %v1798, 16
        %v1800 = vadd.s32 %v1799, %v1797
        %vm1801 = vcmp.eq.s32.totalorder %v1501, 3
        %v1802 = vsel %vm1801, %v1800, %v1785
        %vm1803 = vcmp.eq.s32.totalorder %v1501, %v1800
        %v1804 = vsel %vm1803, %v1592, 0
        %v1805 = vsel %vm1485, %v1804, 0
        %v1806 = vand.u32 %v1805, 65535
        %v1807 = vshrl.u32 %v1805, 16
        %v1808 = vcvt.s32.f32 %v1806
        %v1809 = vcvt.s32.f32 %v1807
        %1810 = vadd.xlane.f32.xlu0 %v1808
        %v1811 = vpop.xlane.xlu0 %1810
        %1812 = vadd.xlane.f32.xlu0 %v1809
        %v1813 = vpop.xlane.xlu0 %1812
        %v1814 = vcvt.f32.s32 %v1811
        %v1815 = vcvt.f32.s32 %v1813
        %v1816 = vshll.u32 %v1815, 16
        %v1817 = vadd.s32 %v1816, %v1814
        %vm1818 = vcmp.eq.s32.totalorder %v1501, 2
        %v1819 = vsel %vm1818, %v1817, %v1802
        %vm1820 = vcmp.eq.s32.totalorder %v1501, %v1817
        %v1821 = vsel %vm1820, %v1566, 0
        %v1822 = vsel %vm1485, %v1821, 0
        %v1823 = vand.u32 %v1822, 65535
        %v1824 = vshrl.u32 %v1822, 16
        %v1825 = vcvt.s32.f32 %v1823
        %v1826 = vcvt.s32.f32 %v1824
        %1827 = vadd.xlane.f32.xlu0 %v1825
        %v1828 = vpop.xlane.xlu0 %1827
        %1829 = vadd.xlane.f32.xlu0 %v1826
        %v1830 = vpop.xlane.xlu0 %1829
        %v1831 = vcvt.f32.s32 %v1828
        %v1832 = vcvt.f32.s32 %v1830
        %v1833 = vshll.u32 %v1832, 16
        %v1834 = vadd.s32 %v1833, %v1831
        %vm1835 = vcmp.eq.s32.totalorder %v1501, 1
        %v1836 = vsel %vm1835, %v1834, %v1819
        %vm1837 = vcmp.eq.s32.totalorder %v1501, %v1834
        %v1838 = vsel %vm1837, %v1540, 0
        %v1839 = vsel %vm1485, %v1838, 0
        %v1840 = vand.u32 %v1839, 65535
        %v1841 = vshrl.u32 %v1839, 16
        %v1842 = vcvt.s32.f32 %v1840
        %v1843 = vcvt.s32.f32 %v1841
        %1844 = vadd.xlane.f32.xlu0 %v1842
        %v1845 = vpop.xlane.xlu0 %1844
        %1846 = vadd.xlane.f32.xlu0 %v1843
        %v1847 = vpop.xlane.xlu0 %1846
        %v1848 = vcvt.f32.s32 %v1845
        %v1849 = vcvt.f32.s32 %v1847
        %v1850 = vshll.u32 %v1849, 16
        %v1851 = vadd.s32 %v1850, %v1848
        %vm1852 = vcmp.eq.s32.totalorder %v1501, 0
        %v1853 = vsel %vm1852, %v1851, %v1836
        %vm1854 = vcmask 57344
        %1855 = vst.msk [vmem:[%s287] sm:$0x1] %vm1854, %v1853
        %p1856 = scmp.lt.s32.totalorder %s32, 1
        %s1857 = scalar_select %p1856, %s32, 1
        %s1858 = scalar_lea.vmem %s7, %s1857
        %s1859 = sand.u32 %s192, 1
        %s1860 = scalar_lea.sflag [#allocation6], %s1859
        %s1861 = sand.u32 %s192, 1
        %s1862 = scalar_lea.vmem [#allocation7], %s1861
        // Predicated region
        $region49: #{tpu_custom_call.1} parent=43 // pred_check
          %p1863 = pneg %p176
        $region50: #{tpu_custom_call.1} parent=43 // pred_check_branch
          %1865 = sbr.rel (%p1863) target = $region52
        $region51: #{tpu_custom_call.1} parent=43 // pred_region
          _
        $region52: #{tpu_custom_call.1} parent=43 // pred_fallthru
          _
        // Predicated region
        $region53: #{tpu_custom_call.1} parent=43 // pred_check
          %p1866 = pneg %p202
        $region54: #{tpu_custom_call.1} parent=43 // pred_check_branch
          %1868 = sbr.rel (%p1866) target = $region56
        $region55: #{tpu_custom_call.1} parent=43 // pred_region
          %1870 = vsyncadd %s1860, 0
          %s1871 = scalar_lea.hbm %s8, %s32
          %s1873 = sshll.u32 %s1862, 4
          %s1874 = int_to_ptr.vmem [resolvable:$true] %s1873
          %s1875 = sshll.u32 %s1871, 4
          %s1876 = int_to_ptr.hbm [resolvable:$true] %s1875
          %1878 = dma.vmem_to_hbm [thread:$0]  %s1874, 16, %s1876, %s1860
        $region56: #{tpu_custom_call.1} parent=43 // pred_fallthru
          _
      $region44: #{tpu_custom_call.1} parent=5 // pred_fallthru
        _
      %p1879 = scmp.le.s32.totalorder 2, %s27
      // Predicated region
      $region57: #{tpu_custom_call.1} parent=5 // pred_check
        %p1880 = pneg %p1879
      $region58: #{tpu_custom_call.1} parent=5 // pred_check_branch
        %1882 = sbr.rel (%p1880) target = $region60
      $region59: #{tpu_custom_call.1} parent=5 // pred_region
        %s1883 = ssub.s32 %s27, 2
        // Predicated region
        $region61: #{tpu_custom_call.1} parent=59 // pred_check
          %p1884 = pneg %p182
        $region62: #{tpu_custom_call.1} parent=59 // pred_check_branch
          %1886 = sbr.rel (%p1884) target = $region64
        $region63: #{tpu_custom_call.1} parent=59 // pred_region
          %p1887 = scmp.lt.s32.totalorder %s33, 1
          %s1888 = scalar_select %p1887, %s33, 1
          %s1889 = scalar_lea.vmem %s7, %s1888
        $region64: #{tpu_custom_call.1} parent=59 // pred_fallthru
          _
        // Predicated region
        $region65: #{tpu_custom_call.1} parent=59 // pred_check
          %p1890 = pneg %p208
        $region66: #{tpu_custom_call.1} parent=59 // pred_check_branch
          %1892 = sbr.rel (%p1890) target = $region68
        $region67: #{tpu_custom_call.1} parent=59 // pred_region
          %s1893 = sand.u32 %s193, 1
          %s1894 = scalar_lea.sflag [#allocation6], %s1893
          %s1895 = sand.u32 %s193, 1
          %s1896 = scalar_lea.vmem [#allocation7], %s1895
          %1898 = dma.done %s1894, 16
        $region68: #{tpu_custom_call.1} parent=59 // pred_fallthru
          _
      $region60: #{tpu_custom_call.1} parent=5 // pred_fallthru
        _
    $region6: #{tpu_custom_call.1} parent=1 // loop_footer
      %s31 = sadd.s32 1, %s27
    $region7: #{tpu_custom_call.1} parent=1 // loop_footer_branch
      %26 = sbr.rel target = $region3
    $region8: #{tpu_custom_call.1} parent=1 // loop_exit
      _
    %1899 = vsyncpa [#allocation5], 1
    %s1900 = scalar_lea.sflag [#allocation5], 1
    %1901 = vsyncpa %s1900, 1
    %1902 = vsyncpa [#allocation6], 1
    %s1903 = scalar_lea.sflag [#allocation6], 1
    %1904 = vsyncpa %s1903, 1

</llo_original>
